<compile_context>
chip_gen: v6e
topology: v6e:2x2x1
jax: 0.10.0
libtpu: 0.0.40
codegen_flags: <defaults>
</compile_context>

<pallas_src>
import math

import numpy as np
import jax
import jax.numpy as jnp
from jax.experimental import pallas as pl
from jax.experimental.pallas import tpu as pltpu

# ----------------------------- configuration --------------------------------
N_LEVELS = 4          # cf.nLevels    -> input image is 2**4 = 16 x 16
BASE_LEVEL = 2        # cf.baseLevel  -> base resolution 4 x 4
IM_C = 4              # cf.imShape[0]
COND_C = 8            # synthetic conditioning-encoder channels
BATCH = 2

assert N_LEVELS - BASE_LEVEL == 2, "fused kernel is specialised to 2 sub-levels + base"

IMG = 2 ** N_LEVELS              # 16
H4 = IMG // 2                    # 8   spatial size after the level-4 DWT
H3 = IMG // 4                    # 4   spatial size after the level-3 DWT (= base)
M4 = BATCH * H4 * H4             # 128 rows processed at level 4
M3 = BATCH * H3 * H3             # 32  rows processed at level 3 / base
CZ = 3 * IM_C                    # 12  detail ("high") channels per level

_LN2 = math.log(2.0)
_HALF_LOG_2PI = 0.5 * math.log(2.0 * math.pi)


# --------------------- constant (numpy) transform matrices ------------------
def _dwt_low_matrix(c):
    """(4c, c): corner-packed [TL|TR|BL|BR] -> Haar low band (0.5 * sum)."""
    k = np.zeros((4 * c, c), np.float32)
    for ci in range(c):
        for j in range(4):
            k[j * c + ci, ci] = 0.5
    return k


def _dwt_high_matrix(c):
    """(4c, 3c): corner-packed -> Haar detail bands (H, V, D), band-major."""
    k = np.zeros((4 * c, 3 * c), np.float32)
    signs = ((1.0, -1.0, 1.0, -1.0),   # horizontal: TL - TR + BL - BR
             (1.0, 1.0, -1.0, -1.0),   # vertical:   TL + TR - BL - BR
             (1.0, -1.0, -1.0, 1.0))   # diagonal:   TL - TR - BL + BR
    for band, sg in enumerate(signs):
        for ci in range(c):
            for j in range(4):
                k[j * c + ci, band * c + ci] = 0.5 * sg[j]
    return k


def _regroup_selectors(m_out):
    """(4*m_out, 4*m_out) stacked row-selectors: block j picks rows 4g + j.

    Because the level-4 rows are in depth-2 Morton order, the 4 corners of
    every next-level pixel are 4 consecutive rows, so the in-kernel corner
    regroup is  concat_j( sel_j @ low4 )  -- pure MXU work on VMEM data.
    """
    s = np.zeros((4 * m_out, 4 * m_out), np.float32)
    for j in range(4):
        for g in range(m_out):
            s[j * m_out + g, 4 * g + j] = 1.0
    return s


def _batch_selector(batch, rows_per_batch):
    """(batch, batch*rows): bsel[b, r] = 1 iff row r belongs to batch b."""
    s = np.zeros((batch, batch * rows_per_batch), np.float32)
    for b in range(batch):
        s[b, b * rows_per_batch:(b + 1) * rows_per_batch] = 1.0
    return s


# ----------------------------- the fused kernel ------------------------------
def _fused_kernel(xc_ref, rhs4_ref, wc4_ref, vec4_ref,
                  rhs3_ref, wc3_ref, vec3_ref, sel_ref,
                  vecb_ref, bsel4_ref, bsel3_ref, lls_ref, llc_ref,
                  z4_ref, z3_ref, zb_ref, ll_ref):
    f32 = jnp.float32

    # ---- level N_LEVELS (16x16 -> 8x8): Haar DWT + encoder + cond. affine flow.
    # One shared-LHS MXU pass: lanes of y4 = [low(4) | high(12) | enc_pre(8)].
    xc = xc_ref[...]                                                  # (M4, 4C)
    y4 = jnp.dot(xc, rhs4_ref[...], preferred_element_type=f32)       # (M4, 24)
    v4 = vec4_ref[...]                                                # (1, 32)
    cond4 = jnp.maximum(y4[:, 4 * IM_C:] + v4[:, :COND_C], 0.0)       # (M4, 8)
    z4 = ((y4[:, IM_C:4 * IM_C]
           + jnp.dot(cond4, wc4_ref[...], preferred_element_type=f32))
          * v4[:, COND_C:COND_C + CZ] + v4[:, COND_C + CZ:])          # (M4, 12)
    z4_ref[...] = z4

    # ---- level N_LEVELS-1 (8x8 -> 4x4): regroup the VMEM-resident low image
    # into corner-packed rows with 4 selector matmuls, then the same fused flow.
    low4 = y4[:, :IM_C]                                               # (M4, 4)
    sel = sel_ref[...]                                                # (4*M3, M4)
    xc3 = jnp.concatenate(
        [jnp.dot(sel[j * M3:(j + 1) * M3, :], low4, preferred_element_type=f32)
         for j in range(4)], axis=1)                                  # (M3, 4C)
    y3 = jnp.dot(xc3, rhs3_ref[...], preferred_element_type=f32)      # (M3, 24)
    v3 = vec3_ref[...]
    cond3 = jnp.maximum(y3[:, 4 * IM_C:] + v3[:, :COND_C], 0.0)
    z3 = ((y3[:, IM_C:4 * IM_C]
           + jnp.dot(cond3, wc3_ref[...], preferred_element_type=f32))
          * v3[:, COND_C:COND_C + CZ] + v3[:, COND_C + CZ:])          # (M3, 12)
    z3_ref[...] = z3

    # ---- base level: unconditional per-pixel affine flow on the 4x4 low image.
    low3 = y3[:, :IM_C]                                               # (M3, 4)
    vb = vecb_ref[...]                                                # (1, 8)
    zb = low3 * vb[:, :IM_C] + vb[:, IM_C:]
    zb_ref[...] = zb

    # ---- Glow-style bits-per-dim likelihood for every level.  exp(log_s),
    # logdet, the Gaussian constant and the (n_levels - level) correction are
    # folded into lls/llc at prepare time; per-batch sums are constant
    # batch-selector matmuls (no per-batch unroll).
    rs4 = jnp.sum(z4 * z4, axis=1, keepdims=True)                     # (M4, 1)
    rs3 = jnp.sum(z3 * z3, axis=1, keepdims=True)                     # (M3, 1)
    rsb = jnp.sum(zb * zb, axis=1, keepdims=True)                     # (M3, 1)
    ll = jnp.concatenate(
        [jnp.dot(bsel4_ref[...], rs4, preferred_element_type=f32),
         jnp.dot(bsel3_ref[...], rs3, preferred_element_type=f32),
         jnp.dot(bsel3_ref[...], rsb, preferred_element_type=f32)], axis=1)
    ll_ref[...] = ll * lls_ref[...] + llc_ref[...]                    # (B, 3)


def _spec(shape):
    return pl.BlockSpec(shape, lambda i: (0,) * len(shape))


def _fused_forward_call(xc4, prep):
    out_shape = (jax.ShapeDtypeStruct((M4, CZ), jnp.float32),
                 jax.ShapeDtypeStruct((M3, CZ), jnp.float32),
                 jax.ShapeDtypeStruct((M3, IM_C), jnp.float32),
                 jax.ShapeDtypeStruct((BATCH, 3), jnp.float32))
    in_arrays = (xc4, prep['rhs4'], prep['wc4'], prep['vec4'],
                 prep['rhs3'], prep['wc3'], prep['vec3'], prep['sel'],
                 prep['vecb'], prep['bsel4'], prep['bsel3'],
                 prep['lls'], prep['llc'])
    return pl.pallas_call(
        _fused_kernel,
        out_shape=out_shape,
        grid=(1,),
        in_specs=[_spec(a.shape) for a in in_arrays],
        out_specs=tuple(_spec(s.shape) for s in out_shape),
        compiler_params=pltpu.CompilerParams(dimension_semantics=("arbitrary",)),
    )(*in_arrays)


# ----------------------------- host-side layout glue -------------------------
def _pack_morton_corners(x):
    """(B, C, H, W) NCHW -> (B*(H//2)*(W//2), 4C) corner-packed rows
    [TL C | TR C | BL C | BR C] in depth-2 Morton order, so the next level's
    corner regroup is 4 consecutive rows (done in-kernel, in VMEM)."""
    b, c, h, w = x.shape
    t = x.reshape(b, c, h // 4, 2, 2, w // 4, 2, 2)
    #            (B, C, p_hi, p_lo, hp, q_hi, q_lo, wp)
    t = jnp.transpose(t, (0, 2, 5, 3, 6, 4, 7, 1))
    return t.reshape(b * (h // 2) * (w // 2), 4 * c)


def _unpack_morton(z, b, hh, cz):
    """rows in depth-2 Morton order of an hh x hh grid -> (B, cz, hh, hh)."""
    t = z.reshape(b, hh // 2, hh // 2, 2, 2, cz)
    t = jnp.transpose(t, (0, 5, 1, 3, 2, 4))
    return t.reshape(b, cz, hh, hh)


def _unpack_rowmajor(z, b, hh, cz):
    return jnp.transpose(z.reshape(b, hh, hh, cz), (0, 3, 1, 2))


# ----------------------------- WaveletFlow forward ---------------------------
def waveletflow_forward(x, prep, partial_level=-1):
    """Mirrors WaveletFlow.forward for the (N_LEVELS=4, BASE_LEVEL=2) config.

    x: (BATCH, IM_C, 16, 16) NCHW float32.  One pallas_call computes every
    level; for partial_level != -1 the unused levels' results are simply not
    returned (observationally identical to the reference control flow).
    """
    assert x.shape == (BATCH, IM_C, IMG, IMG)
    xc4 = _pack_morton_corners(x)
    z4, z3, zb, ll = _fused_forward_call(xc4, prep)
    # likelihood lanes: 0 = level N_LEVELS, 1 = level N_LEVELS-1, 2 = base;
    # each already carries its own +(N_LEVELS - level) correction
    # (reference:  likelihood -= c*h*w*log(0.5)*(n-l)/(log2*c*h*w)  ==  += (n-l)).
    if partial_level == -1:
        latents = [_unpack_morton(z4, BATCH, H4, CZ),
                   _unpack_rowmajor(z3, BATCH, H3, CZ),
                   _unpack_rowmajor(zb, BATCH, H3, IM_C)]
        likelihood = ll[:, 2]
    elif partial_level == N_LEVELS:
        latents = [_unpack_morton(z4, BATCH, H4, CZ)]
        likelihood = ll[:, 0]
    elif partial_level == N_LEVELS - 1:
        latents = [None, _unpack_rowmajor(z3, BATCH, H3, CZ)]
        likelihood = ll[:, 1]
    elif partial_level == BASE_LEVEL:
        latents = [None, None, _unpack_rowmajor(zb, BATCH, H3, IM_C)]
        likelihood = ll[:, 2]
    else:
        raise ValueError("unsupported partial_level for this configuration")
    return {'latent': latents, 'likelihood': likelihood}


# ----------------------------- parameters ------------------------------------
def init_params(key):
    """Deterministic synthetic stand-ins for Glow / conditioning network."""
    # TODO(synk): real Glow internals (actnorm / inv-1x1 / coupling stacks) and
    # the real conditioning network are not reproducible from the given source.
    params = {'enc': {}, 'flow': {}}
    for level in range(BASE_LEVEL + 1, N_LEVELS + 1):
        key, k1, k2, k3, k4, k5 = jax.random.split(key, 6)
        params['enc'][level] = {
            'w': 0.1 * jax.random.normal(k1, (IM_C, COND_C), jnp.float32),
            'b': 0.01 * jax.random.normal(k2, (1, COND_C), jnp.float32),
        }
        params['flow'][level] = {
            'w_cond': 0.1 * jax.random.normal(k3, (COND_C, CZ), jnp.float32),
            'log_s': 0.05 * jax.random.normal(k4, (1, CZ), jnp.float32),
            'bias': 0.05 * jax.random.normal(k5, (1, CZ), jnp.float32),
        }
    key, kb1, kb2 = jax.random.split(key, 3)
    params['base'] = {
        'log_s': 0.05 * jax.random.normal(kb1, (1, IM_C), jnp.float32),
        'bias': 0.05 * jax.random.normal(kb2, (1, IM_C), jnp.float32),
    }
    return params


def prepare_params(params):
    """Fold everything foldable into kernel operands:
      * Haar low/high + (low-folded) encoder weights -> one (4C, 4C+COND_C) RHS
      * exp(log_s), bias, encoder bias -> one (1, 32) lane vector per level
      * logdet, Gaussian constant, bits/dim denominator and the per-level
        correction -> (1, 3) scale / offset constants for the likelihood.
    """
    c, cz = IM_C, CZ
    k_low = jnp.asarray(_dwt_low_matrix(c))
    k_high = jnp.asarray(_dwt_high_matrix(c))
    n4, n3 = H4 * H4, H3 * H3
    prep = {
        'sel': jnp.asarray(_regroup_selectors(M3)),               # (128, 128)
        'bsel4': jnp.asarray(_batch_selector(BATCH, n4)),         # (B, 128)
        'bsel3': jnp.asarray(_batch_selector(BATCH, n3)),         # (B, 32)
        'lls': jnp.asarray(np.array([[-0.5 / (_LN2 * n4 * cz),
                                      -0.5 / (_LN2 * n3 * cz),
                                      -0.5 / (_LN2 * n3 * c)]], np.float32)),
    }
    llc = []
    for level, tag in ((N_LEVELS, '4'), (N_LEVELS - 1, '3')):
        enc, fl = params['enc'][level], params['flow'][level]
        n_pix = (2 ** (level - 1)) ** 2
        # cond = relu(low @ W + b) with low = 0.5*(TL+TR+BL+BR)
        #      = relu(xc @ (0.5*tile(W, 4)) + b)
        prep['rhs' + tag] = jnp.concatenate(
            [k_low, k_high, 0.5 * jnp.tile(enc['w'], (4, 1))], axis=1)   # (16, 24)
        prep['wc' + tag] = fl['w_cond']                                   # (8, 12)
        prep['vec' + tag] = jnp.concatenate(
            [enc['b'], jnp.exp(fl['log_s']), fl['bias']], axis=1)         # (1, 32)
        logdet = n_pix * jnp.sum(fl['log_s'])
        llc.append((-_HALF_LOG_2PI * n_pix * cz + logdet) / (_LN2 * n_pix * cz)
                   + float(N_LEVELS - level))
    pb = params['base']
    prep['vecb'] = jnp.concatenate([jnp.exp(pb['log_s']), pb['bias']], axis=1)
    n_pix_b = (2 ** BASE_LEVEL) ** 2
    logdet_b = n_pix_b * jnp.sum(pb['log_s'])
    llc.append((-_HALF_LOG_2PI * n_pix_b * c + logdet_b) / (_LN2 * n_pix_b * c)
               + float(N_LEVELS - BASE_LEVEL))
    prep['llc'] = jnp.stack(llc).reshape(1, 3).astype(jnp.float32)
    return prep


# ----------------------------- pure-JAX reference ----------------------------
def _reference_forward(x, params):
    """Straightforward NCHW implementation of the same synthetic model,
    used only to validate the fused kernel (partial_level == -1 path)."""
    hi = jax.lax.Precision.HIGHEST

    def dwt(img):
        a = img[:, :, 0::2, 0::2]; b_ = img[:, :, 0::2, 1::2]
        c_ = img[:, :, 1::2, 0::2]; d_ = img[:, :, 1::2, 1::2]
        low = 0.5 * (a + b_ + c_ + d_)
        high = jnp.concatenate([0.5 * (a - b_ + c_ - d_),
                                0.5 * (a + b_ - c_ - d_),
                                0.5 * (a - b_ - c_ + d_)], axis=1)
        return low, high

    def gauss_ll(z, log_s):
        b, c, h, w = z.shape
        logdet = h * w * jnp.sum(log_s)
        logp = jnp.sum(-0.5 * z * z - _HALF_LOG_2PI, axis=(1, 2, 3))
        return (logp + logdet) / (_LN2 * c * h * w)

    latents, likelihood, low_freq = [], None, x
    for level in range(N_LEVELS, BASE_LEVEL - 1, -1):
        if level == BASE_LEVEL:
            pb = params['base']
            z = low_freq * jnp.exp(pb['log_s']).reshape(1, -1, 1, 1) \
                + pb['bias'].reshape(1, -1, 1, 1)
            ll = gauss_ll(z, pb['log_s'])
        else:
            low, high = dwt(low_freq)
            low_freq = low
            enc, fl = params['enc'][level], params['flow'][level]
            cond = jnp.maximum(
                jnp.einsum('bchw,cd->bdhw', low, enc['w'], precision=hi)
                + enc['b'].reshape(1, -1, 1, 1), 0.0)
            shift = jnp.einsum('bchw,cd->bdhw', cond, fl['w_cond'], precision=hi)
            z = (high + shift) * jnp.exp(fl['log_s']).reshape(1, -1, 1, 1) \
                + fl['bias'].reshape(1, -1, 1, 1)
            ll = gauss_ll(z, fl['log_s'])
        latents.append(z)
        likelihood = ll + float(N_LEVELS - level)
    return latents, likelihood


# ----------------------------------- main ------------------------------------
if __name__ == "__main__":
    key = jax.random.PRNGKey(0)
    kx, kp = jax.random.split(key)
    x = jax.random.normal(kx, (BATCH, IM_C, IMG, IMG), jnp.float32)
    params = init_params(kp)
    prep = prepare_params(params)

    fwd = jax.jit(waveletflow_forward, static_argnames=("partial_level",))
    out = fwd(x, prep, partial_level=-1)

    jax.block_until_ready(out['likelihood'])
    for lat in out['latent']:
        if lat is not None:
            jax.block_until_ready(lat)

    # Shape checks (levels 4, 3, 2 processed -> 3 latents).
    assert out['likelihood'].shape == (BATCH,)
    assert len(out['latent']) == N_LEVELS - BASE_LEVEL + 1
    assert out['latent'][0].shape == (BATCH, CZ, H4, H4)
    assert out['latent'][1].shape == (BATCH, CZ, H3, H3)
    assert out['latent'][2].shape == (BATCH, IM_C, H3, H3)

    # Numerical check against a plain-JAX reference of the same synthetic model.
    ref_lat, ref_ll = _reference_forward(x, params)
    np.testing.assert_allclose(np.asarray(out['likelihood']), np.asarray(ref_ll),
                               rtol=2e-2, atol=2e-2)
    for got, want in zip(out['latent'], ref_lat):
        np.testing.assert_allclose(np.asarray(got), np.asarray(want),
                                   rtol=2e-2, atol=2e-2)
    assert np.all(np.isfinite(np.asarray(out['likelihood'])))

    print("KERNEL_OK")
</pallas_src>

<mosaic_0001>
module attributes {stable_mosaic.version = 11 : i64} {
  func.func @_fused_kernel(%arg0: i32, %arg1: memref<128x16xf32, #tpu.memory_space<vmem>>, %arg2: memref<16x24xf32, #tpu.memory_space<vmem>>, %arg3: memref<8x12xf32, #tpu.memory_space<vmem>>, %arg4: memref<1x32xf32, #tpu.memory_space<vmem>>, %arg5: memref<16x24xf32, #tpu.memory_space<vmem>>, %arg6: memref<8x12xf32, #tpu.memory_space<vmem>>, %arg7: memref<1x32xf32, #tpu.memory_space<vmem>>, %arg8: memref<128x128xf32, #tpu.memory_space<vmem>>, %arg9: memref<1x8xf32, #tpu.memory_space<vmem>>, %arg10: memref<2x128xf32, #tpu.memory_space<vmem>>, %arg11: memref<2x32xf32, #tpu.memory_space<vmem>>, %arg12: memref<1x3xf32, #tpu.memory_space<vmem>>, %arg13: memref<1x3xf32, #tpu.memory_space<vmem>>, %arg14: memref<128x12xf32, #tpu.memory_space<vmem>>, %arg15: memref<32x12xf32, #tpu.memory_space<vmem>>, %arg16: memref<32x4xf32, #tpu.memory_space<vmem>>, %arg17: memref<2x3xf32, #tpu.memory_space<vmem>>) attributes {dimension_semantics = [#tpu.dimension_semantics<arbitrary>], iteration_bounds = array<i64: 1>, scalar_prefetch = 0 : i64, scratch_operands = 0 : i64, tpu.core_type = #tpu.core_type<tc>, window_params = [{pipeline_mode = #tpu.pipeline_mode<synchronous>, transform_indices = @transform_0, window_bounds = array<i64: 128, 16>}, {pipeline_mode = #tpu.pipeline_mode<synchronous>, transform_indices = @transform_1, window_bounds = array<i64: 16, 24>}, {pipeline_mode = #tpu.pipeline_mode<synchronous>, transform_indices = @transform_2, window_bounds = array<i64: 8, 12>}, {pipeline_mode = #tpu.pipeline_mode<synchronous>, transform_indices = @transform_3, window_bounds = array<i64: 1, 32>}, {pipeline_mode = #tpu.pipeline_mode<synchronous>, transform_indices = @transform_4, window_bounds = array<i64: 16, 24>}, {pipeline_mode = #tpu.pipeline_mode<synchronous>, transform_indices = @transform_5, window_bounds = array<i64: 8, 12>}, {pipeline_mode = #tpu.pipeline_mode<synchronous>, transform_indices = @transform_6, window_bounds = array<i64: 1, 32>}, {pipeline_mode = #tpu.pipeline_mode<synchronous>, transform_indices = @transform_7, window_bounds = array<i64: 128, 128>}, {pipeline_mode = #tpu.pipeline_mode<synchronous>, transform_indices = @transform_8, window_bounds = array<i64: 1, 8>}, {pipeline_mode = #tpu.pipeline_mode<synchronous>, transform_indices = @transform_9, window_bounds = array<i64: 2, 128>}, {pipeline_mode = #tpu.pipeline_mode<synchronous>, transform_indices = @transform_10, window_bounds = array<i64: 2, 32>}, {pipeline_mode = #tpu.pipeline_mode<synchronous>, transform_indices = @transform_11, window_bounds = array<i64: 1, 3>}, {pipeline_mode = #tpu.pipeline_mode<synchronous>, transform_indices = @transform_12, window_bounds = array<i64: 1, 3>}, {pipeline_mode = #tpu.pipeline_mode<synchronous>, transform_indices = @transform_13, window_bounds = array<i64: 128, 12>}, {pipeline_mode = #tpu.pipeline_mode<synchronous>, transform_indices = @transform_14, window_bounds = array<i64: 32, 12>}, {pipeline_mode = #tpu.pipeline_mode<synchronous>, transform_indices = @transform_15, window_bounds = array<i64: 32, 4>}, {pipeline_mode = #tpu.pipeline_mode<synchronous>, transform_indices = @transform_16, window_bounds = array<i64: 2, 3>}]} {
    %c0 = arith.constant 0 : index
    %c0_0 = arith.constant 0 : index
    %0 = vector.load %arg1[%c0, %c0_0] : memref<128x16xf32, #tpu.memory_space<vmem>>, vector<128x16xf32>
    %c0_1 = arith.constant 0 : index
    %c0_2 = arith.constant 0 : index
    %1 = vector.load %arg2[%c0_1, %c0_2] : memref<16x24xf32, #tpu.memory_space<vmem>>, vector<16x24xf32>
    %cst = arith.constant dense<0.000000e+00> : vector<128x24xf32>
    %2 = tpu.matmul %0, %1, %cst {dimension_numbers = #tpu.dot_dimension_numbers<[1], [0], [0], [1], [0, 0, 1, 1], [], []>} : vector<128x16xf32>, vector<16x24xf32>, vector<128x24xf32> -> vector<128x24xf32>
    %c0_3 = arith.constant 0 : index
    %c0_4 = arith.constant 0 : index
    %3 = vector.load %arg4[%c0_3, %c0_4] : memref<1x32xf32, #tpu.memory_space<vmem>>, vector<1x32xf32>
    %4 = vector.extract_strided_slice %2 {offsets = [0, 16], sizes = [128, 8], strides = [1, 1]} : vector<128x24xf32> to vector<128x8xf32>
    %5 = vector.extract_strided_slice %3 {offsets = [0, 0], sizes = [1, 8], strides = [1, 1]} : vector<1x32xf32> to vector<1x8xf32>
    %6 = vector.broadcast %5 : vector<1x8xf32> to vector<128x8xf32>
    %7 = arith.addf %4, %6 : vector<128x8xf32>
    %cst_5 = arith.constant 0.000000e+00 : f32
    %8 = vector.broadcast %cst_5 : f32 to vector<128x8xf32>
    %9 = arith.maximumf %7, %8 : vector<128x8xf32>
    %10 = vector.extract_strided_slice %2 {offsets = [0, 4], sizes = [128, 12], strides = [1, 1]} : vector<128x24xf32> to vector<128x12xf32>
    %c0_6 = arith.constant 0 : index
    %c0_7 = arith.constant 0 : index
    %11 = vector.load %arg3[%c0_6, %c0_7] : memref<8x12xf32, #tpu.memory_space<vmem>>, vector<8x12xf32>
    %cst_8 = arith.constant dense<0.000000e+00> : vector<128x12xf32>
    %12 = tpu.matmul %9, %11, %cst_8 {dimension_numbers = #tpu.dot_dimension_numbers<[1], [0], [0], [1], [0, 0, 1, 1], [], []>} : vector<128x8xf32>, vector<8x12xf32>, vector<128x12xf32> -> vector<128x12xf32>
    %13 = arith.addf %10, %12 : vector<128x12xf32>
    %14 = vector.extract_strided_slice %3 {offsets = [0, 8], sizes = [1, 12], strides = [1, 1]} : vector<1x32xf32> to vector<1x12xf32>
    %15 = vector.broadcast %14 : vector<1x12xf32> to vector<128x12xf32>
    %16 = arith.mulf %13, %15 : vector<128x12xf32>
    %17 = vector.extract_strided_slice %3 {offsets = [0, 20], sizes = [1, 12], strides = [1, 1]} : vector<1x32xf32> to vector<1x12xf32>
    %18 = vector.broadcast %17 : vector<1x12xf32> to vector<128x12xf32>
    %19 = arith.addf %16, %18 : vector<128x12xf32>
    %c0_9 = arith.constant 0 : index
    %c0_10 = arith.constant 0 : index
    %20 = vector.load %arg14[%c0_9, %c0_10] : memref<128x12xf32, #tpu.memory_space<vmem>>, vector<128x12xf32>
    tpu.vector_store %arg14[%c0_9, %c0_10], %19 {strides = array<i32>} : memref<128x12xf32, #tpu.memory_space<vmem>>, vector<128x12xf32>,
    %21 = vector.extract_strided_slice %2 {offsets = [0, 0], sizes = [128, 4], strides = [1, 1]} : vector<128x24xf32> to vector<128x4xf32>
    %c0_11 = arith.constant 0 : index
    %c0_12 = arith.constant 0 : index
    %22 = vector.load %arg8[%c0_11, %c0_12] : memref<128x128xf32, #tpu.memory_space<vmem>>, vector<128x128xf32>
    %23 = vector.extract_strided_slice %22 {offsets = [0, 0], sizes = [32, 128], strides = [1, 1]} : vector<128x128xf32> to vector<32x128xf32>
    %cst_13 = arith.constant dense<0.000000e+00> : vector<32x4xf32>
    %24 = tpu.matmul %23, %21, %cst_13 {dimension_numbers = #tpu.dot_dimension_numbers<[1], [0], [0], [1], [0, 0, 1, 1], [], []>} : vector<32x128xf32>, vector<128x4xf32>, vector<32x4xf32> -> vector<32x4xf32>
    %25 = vector.extract_strided_slice %22 {offsets = [32, 0], sizes = [32, 128], strides = [1, 1]} : vector<128x128xf32> to vector<32x128xf32>
    %cst_14 = arith.constant dense<0.000000e+00> : vector<32x4xf32>
    %26 = tpu.matmul %25, %21, %cst_14 {dimension_numbers = #tpu.dot_dimension_numbers<[1], [0], [0], [1], [0, 0, 1, 1], [], []>} : vector<32x128xf32>, vector<128x4xf32>, vector<32x4xf32> -> vector<32x4xf32>
    %27 = vector.extract_strided_slice %22 {offsets = [64, 0], sizes = [32, 128], strides = [1, 1]} : vector<128x128xf32> to vector<32x128xf32>
    %cst_15 = arith.constant dense<0.000000e+00> : vector<32x4xf32>
    %28 = tpu.matmul %27, %21, %cst_15 {dimension_numbers = #tpu.dot_dimension_numbers<[1], [0], [0], [1], [0, 0, 1, 1], [], []>} : vector<32x128xf32>, vector<128x4xf32>, vector<32x4xf32> -> vector<32x4xf32>
    %29 = vector.extract_strided_slice %22 {offsets = [96, 0], sizes = [32, 128], strides = [1, 1]} : vector<128x128xf32> to vector<32x128xf32>
    %cst_16 = arith.constant dense<0.000000e+00> : vector<32x4xf32>
    %30 = tpu.matmul %29, %21, %cst_16 {dimension_numbers = #tpu.dot_dimension_numbers<[1], [0], [0], [1], [0, 0, 1, 1], [], []>} : vector<32x128xf32>, vector<128x4xf32>, vector<32x4xf32> -> vector<32x4xf32>
    %31 = tpu.concatenate %24, %26, %28, %30 in 1 : vector<32x4xf32>, vector<32x4xf32>, vector<32x4xf32>, vector<32x4xf32> -> vector<32x16xf32>
    %c0_17 = arith.constant 0 : index
    %c0_18 = arith.constant 0 : index
    %32 = vector.load %arg5[%c0_17, %c0_18] : memref<16x24xf32, #tpu.memory_space<vmem>>, vector<16x24xf32>
    %cst_19 = arith.constant dense<0.000000e+00> : vector<32x24xf32>
    %33 = tpu.matmul %31, %32, %cst_19 {dimension_numbers = #tpu.dot_dimension_numbers<[1], [0], [0], [1], [0, 0, 1, 1], [], []>} : vector<32x16xf32>, vector<16x24xf32>, vector<32x24xf32> -> vector<32x24xf32>
    %c0_20 = arith.constant 0 : index
    %c0_21 = arith.constant 0 : index
    %34 = vector.load %arg7[%c0_20, %c0_21] : memref<1x32xf32, #tpu.memory_space<vmem>>, vector<1x32xf32>
    %35 = vector.extract_strided_slice %33 {offsets = [0, 16], sizes = [32, 8], strides = [1, 1]} : vector<32x24xf32> to vector<32x8xf32>
    %36 = vector.extract_strided_slice %34 {offsets = [0, 0], sizes = [1, 8], strides = [1, 1]} : vector<1x32xf32> to vector<1x8xf32>
    %37 = vector.broadcast %36 : vector<1x8xf32> to vector<32x8xf32>
    %38 = arith.addf %35, %37 : vector<32x8xf32>
    %cst_22 = arith.constant 0.000000e+00 : f32
    %39 = vector.broadcast %cst_22 : f32 to vector<32x8xf32>
    %40 = arith.maximumf %38, %39 : vector<32x8xf32>
    %41 = vector.extract_strided_slice %33 {offsets = [0, 4], sizes = [32, 12], strides = [1, 1]} : vector<32x24xf32> to vector<32x12xf32>
    %c0_23 = arith.constant 0 : index
    %c0_24 = arith.constant 0 : index
    %42 = vector.load %arg6[%c0_23, %c0_24] : memref<8x12xf32, #tpu.memory_space<vmem>>, vector<8x12xf32>
    %cst_25 = arith.constant dense<0.000000e+00> : vector<32x12xf32>
    %43 = tpu.matmul %40, %42, %cst_25 {dimension_numbers = #tpu.dot_dimension_numbers<[1], [0], [0], [1], [0, 0, 1, 1], [], []>} : vector<32x8xf32>, vector<8x12xf32>, vector<32x12xf32> -> vector<32x12xf32>
    %44 = arith.addf %41, %43 : vector<32x12xf32>
    %45 = vector.extract_strided_slice %34 {offsets = [0, 8], sizes = [1, 12], strides = [1, 1]} : vector<1x32xf32> to vector<1x12xf32>
    %46 = vector.broadcast %45 : vector<1x12xf32> to vector<32x12xf32>
    %47 = arith.mulf %44, %46 : vector<32x12xf32>
    %48 = vector.extract_strided_slice %34 {offsets = [0, 20], sizes = [1, 12], strides = [1, 1]} : vector<1x32xf32> to vector<1x12xf32>
    %49 = vector.broadcast %48 : vector<1x12xf32> to vector<32x12xf32>
    %50 = arith.addf %47, %49 : vector<32x12xf32>
    %c0_26 = arith.constant 0 : index
    %c0_27 = arith.constant 0 : index
    %51 = vector.load %arg15[%c0_26, %c0_27] : memref<32x12xf32, #tpu.memory_space<vmem>>, vector<32x12xf32>
    tpu.vector_store %arg15[%c0_26, %c0_27], %50 {strides = array<i32>} : memref<32x12xf32, #tpu.memory_space<vmem>>, vector<32x12xf32>,
    %52 = vector.extract_strided_slice %33 {offsets = [0, 0], sizes = [32, 4], strides = [1, 1]} : vector<32x24xf32> to vector<32x4xf32>
    %c0_28 = arith.constant 0 : index
    %c0_29 = arith.constant 0 : index
    %53 = vector.load %arg9[%c0_28, %c0_29] : memref<1x8xf32, #tpu.memory_space<vmem>>, vector<1x8xf32>
    %54 = vector.extract_strided_slice %53 {offsets = [0, 0], sizes = [1, 4], strides = [1, 1]} : vector<1x8xf32> to vector<1x4xf32>
    %55 = vector.broadcast %54 : vector<1x4xf32> to vector<32x4xf32>
    %56 = arith.mulf %52, %55 : vector<32x4xf32>
    %57 = vector.extract_strided_slice %53 {offsets = [0, 4], sizes = [1, 4], strides = [1, 1]} : vector<1x8xf32> to vector<1x4xf32>
    %58 = vector.broadcast %57 : vector<1x4xf32> to vector<32x4xf32>
    %59 = arith.addf %56, %58 : vector<32x4xf32>
    %c0_30 = arith.constant 0 : index
    %c0_31 = arith.constant 0 : index
    %60 = vector.load %arg16[%c0_30, %c0_31] : memref<32x4xf32, #tpu.memory_space<vmem>>, vector<32x4xf32>
    tpu.vector_store %arg16[%c0_30, %c0_31], %59 {strides = array<i32>} : memref<32x4xf32, #tpu.memory_space<vmem>>, vector<32x4xf32>,
    %61 = arith.mulf %19, %19 : vector<128x12xf32>
    %cst_32 = arith.constant dense<0.000000e+00> : vector<128xf32>
    %62 = vector.multi_reduction <add>, %61, %cst_32 [1] : vector<128x12xf32> to vector<128xf32>
    %63 = vector.shape_cast %62 : vector<128xf32> to vector<128x1xf32>
    %64 = arith.mulf %50, %50 : vector<32x12xf32>
    %cst_33 = arith.constant dense<0.000000e+00> : vector<32xf32>
    %65 = vector.multi_reduction <add>, %64, %cst_33 [1] : vector<32x12xf32> to vector<32xf32>
    %66 = vector.shape_cast %65 : vector<32xf32> to vector<32x1xf32>
    %67 = arith.mulf %59, %59 : vector<32x4xf32>
    %cst_34 = arith.constant dense<0.000000e+00> : vector<32xf32>
    %68 = vector.multi_reduction <add>, %67, %cst_34 [1] : vector<32x4xf32> to vector<32xf32>
    %69 = vector.shape_cast %68 : vector<32xf32> to vector<32x1xf32>
    %c0_35 = arith.constant 0 : index
    %c0_36 = arith.constant 0 : index
    %70 = vector.load %arg10[%c0_35, %c0_36] : memref<2x128xf32, #tpu.memory_space<vmem>>, vector<2x128xf32>
    %cst_37 = arith.constant dense<0.000000e+00> : vector<2x1xf32>
    %71 = tpu.matmul %70, %63, %cst_37 {dimension_numbers = #tpu.dot_dimension_numbers<[1], [0], [0], [1], [0, 0, 1, 1], [], []>} : vector<2x128xf32>, vector<128x1xf32>, vector<2x1xf32> -> vector<2x1xf32>
    %c0_38 = arith.constant 0 : index
    %c0_39 = arith.constant 0 : index
    %72 = vector.load %arg11[%c0_38, %c0_39] : memref<2x32xf32, #tpu.memory_space<vmem>>, vector<2x32xf32>
    %cst_40 = arith.constant dense<0.000000e+00> : vector<2x1xf32>
    %73 = tpu.matmul %72, %66, %cst_40 {dimension_numbers = #tpu.dot_dimension_numbers<[1], [0], [0], [1], [0, 0, 1, 1], [], []>} : vector<2x32xf32>, vector<32x1xf32>, vector<2x1xf32> -> vector<2x1xf32>
    %c0_41 = arith.constant 0 : index
    %c0_42 = arith.constant 0 : index
    %74 = vector.load %arg11[%c0_41, %c0_42] : memref<2x32xf32, #tpu.memory_space<vmem>>, vector<2x32xf32>
    %cst_43 = arith.constant dense<0.000000e+00> : vector<2x1xf32>
    %75 = tpu.matmul %74, %69, %cst_43 {dimension_numbers = #tpu.dot_dimension_numbers<[1], [0], [0], [1], [0, 0, 1, 1], [], []>} : vector<2x32xf32>, vector<32x1xf32>, vector<2x1xf32> -> vector<2x1xf32>
    %76 = tpu.concatenate %71, %73, %75 in 1 : vector<2x1xf32>, vector<2x1xf32>, vector<2x1xf32> -> vector<2x3xf32>
    %c0_44 = arith.constant 0 : index
    %c0_45 = arith.constant 0 : index
    %77 = vector.load %arg12[%c0_44, %c0_45] : memref<1x3xf32, #tpu.memory_space<vmem>>, vector<1x3xf32>
    %78 = vector.broadcast %77 : vector<1x3xf32> to vector<2x3xf32>
    %79 = arith.mulf %76, %78 : vector<2x3xf32>
    %c0_46 = arith.constant 0 : index
    %c0_47 = arith.constant 0 : index
    %80 = vector.load %arg13[%c0_46, %c0_47] : memref<1x3xf32, #tpu.memory_space<vmem>>, vector<1x3xf32>
    %81 = vector.broadcast %80 : vector<1x3xf32> to vector<2x3xf32>
    %82 = arith.addf %79, %81 : vector<2x3xf32>
    %c0_48 = arith.constant 0 : index
    %c0_49 = arith.constant 0 : index
    %83 = vector.load %arg17[%c0_48, %c0_49] : memref<2x3xf32, #tpu.memory_space<vmem>>, vector<2x3xf32>
    tpu.vector_store %arg17[%c0_48, %c0_49], %82 {strides = array<i32>} : memref<2x3xf32, #tpu.memory_space<vmem>>, vector<2x3xf32>,
    return
  }
  func.func @transform_0(%arg0: i32) -> (i32, i32) {
    %c0_i32 = arith.constant 0 : i32
    %c0_i32_0 = arith.constant 0 : i32
    %c0_i32_1 = arith.constant 0 : i32
    return %c0_i32, %c0_i32_0 : i32, i32
  }
  func.func @transform_1(%arg0: i32) -> (i32, i32) {
    %c0_i32 = arith.constant 0 : i32
    %c0_i32_0 = arith.constant 0 : i32
    %c0_i32_1 = arith.constant 0 : i32
    return %c0_i32, %c0_i32_0 : i32, i32
  }
  func.func @transform_2(%arg0: i32) -> (i32, i32) {
    %c0_i32 = arith.constant 0 : i32
    %c0_i32_0 = arith.constant 0 : i32
    %c0_i32_1 = arith.constant 0 : i32
    return %c0_i32, %c0_i32_0 : i32, i32
  }
  func.func @transform_3(%arg0: i32) -> (i32, i32) {
    %c0_i32 = arith.constant 0 : i32
    %c0_i32_0 = arith.constant 0 : i32
    %c0_i32_1 = arith.constant 0 : i32
    return %c0_i32, %c0_i32_0 : i32, i32
  }
  func.func @transform_4(%arg0: i32) -> (i32, i32) {
    %c0_i32 = arith.constant 0 : i32
    %c0_i32_0 = arith.constant 0 : i32
    %c0_i32_1 = arith.constant 0 : i32
    return %c0_i32, %c0_i32_0 : i32, i32
  }
  func.func @transform_5(%arg0: i32) -> (i32, i32) {
    %c0_i32 = arith.constant 0 : i32
    %c0_i32_0 = arith.constant 0 : i32
    %c0_i32_1 = arith.constant 0 : i32
    return %c0_i32, %c0_i32_0 : i32, i32
  }
  func.func @transform_6(%arg0: i32) -> (i32, i32) {
    %c0_i32 = arith.constant 0 : i32
    %c0_i32_0 = arith.constant 0 : i32
    %c0_i32_1 = arith.constant 0 : i32
    return %c0_i32, %c0_i32_0 : i32, i32
  }
  func.func @transform_7(%arg0: i32) -> (i32, i32) {
    %c0_i32 = arith.constant 0 : i32
    %c0_i32_0 = arith.constant 0 : i32
    %c0_i32_1 = arith.constant 0 : i32
    return %c0_i32, %c0_i32_0 : i32, i32
  }
  func.func @transform_8(%arg0: i32) -> (i32, i32) {
    %c0_i32 = arith.constant 0 : i32
    %c0_i32_0 = arith.constant 0 : i32
    %c0_i32_1 = arith.constant 0 : i32
    return %c0_i32, %c0_i32_0 : i32, i32
  }
  func.func @transform_9(%arg0: i32) -> (i32, i32) {
    %c0_i32 = arith.constant 0 : i32
    %c0_i32_0 = arith.constant 0 : i32
    %c0_i32_1 = arith.constant 0 : i32
    return %c0_i32, %c0_i32_0 : i32, i32
  }
  func.func @transform_10(%arg0: i32) -> (i32, i32) {
    %c0_i32 = arith.constant 0 : i32
    %c0_i32_0 = arith.constant 0 : i32
    %c0_i32_1 = arith.constant 0 : i32
    return %c0_i32, %c0_i32_0 : i32, i32
  }
  func.func @transform_11(%arg0: i32) -> (i32, i32) {
    %c0_i32 = arith.constant 0 : i32
    %c0_i32_0 = arith.constant 0 : i32
    %c0_i32_1 = arith.constant 0 : i32
    return %c0_i32, %c0_i32_0 : i32, i32
  }
  func.func @transform_12(%arg0: i32) -> (i32, i32) {
    %c0_i32 = arith.constant 0 : i32
    %c0_i32_0 = arith.constant 0 : i32
    %c0_i32_1 = arith.constant 0 : i32
    return %c0_i32, %c0_i32_0 : i32, i32
  }
  func.func @transform_13(%arg0: i32) -> (i32, i32) {
    %c0_i32 = arith.constant 0 : i32
    %c0_i32_0 = arith.constant 0 : i32
    %c0_i32_1 = arith.constant 0 : i32
    return %c0_i32, %c0_i32_0 : i32, i32
  }
  func.func @transform_14(%arg0: i32) -> (i32, i32) {
    %c0_i32 = arith.constant 0 : i32
    %c0_i32_0 = arith.constant 0 : i32
    %c0_i32_1 = arith.constant 0 : i32
    return %c0_i32, %c0_i32_0 : i32, i32
  }
  func.func @transform_15(%arg0: i32) -> (i32, i32) {
    %c0_i32 = arith.constant 0 : i32
    %c0_i32_0 = arith.constant 0 : i32
    %c0_i32_1 = arith.constant 0 : i32
    return %c0_i32, %c0_i32_0 : i32, i32
  }
  func.func @transform_16(%arg0: i32) -> (i32, i32) {
    %c0_i32 = arith.constant 0 : i32
    %c0_i32_0 = arith.constant 0 : i32
    %c0_i32_1 = arith.constant 0 : i32
    return %c0_i32, %c0_i32_0 : i32, i32
  }
}

</mosaic_0001>

<llo_original>
// kernel: waveletflow_forward.1
$region0: #{waveletflow_forward.1}
  #allocation0 [shape = 'u32[]', space=smem, size = 0x4, offset = 0x4, fixed_abs, tag = 'smem constant byte address 0x4 - core index']
  #allocation1 [shape = 'u32[144,128]{1,0:T(1,128)}', space=vmem, size = 0x12000, scoped, tag = 'internal scratch']
  %s0 = inlined_call_operand.vmem [shape: f32[128,16], index: 0, kind: input, shape index: {}]
  %s1 = inlined_call_operand.vmem [shape: f32[16,24], index: 1, kind: input, shape index: {}]
  %s2 = inlined_call_operand.vmem [shape: f32[8,12], index: 2, kind: input, shape index: {}]
  %s3 = inlined_call_operand.vmem [shape: f32[1,32], index: 3, kind: input, shape index: {}]
  %s4 = inlined_call_operand.vmem [shape: f32[16,24], index: 4, kind: input, shape index: {}]
  %s5 = inlined_call_operand.vmem [shape: f32[8,12], index: 5, kind: input, shape index: {}]
  %s6 = inlined_call_operand.vmem [shape: f32[1,32], index: 6, kind: input, shape index: {}]
  %s7 = inlined_call_operand.vmem [shape: f32[128,128], index: 7, kind: input, shape index: {}]
  %s8 = inlined_call_operand.vmem [shape: f32[1,8], index: 8, kind: input, shape index: {}]
  %s9 = inlined_call_operand.vmem [shape: f32[2,128], index: 9, kind: input, shape index: {}]
  %s10 = inlined_call_operand.vmem [shape: f32[2,32], index: 10, kind: input, shape index: {}]
  %s11 = inlined_call_operand.vmem [shape: f32[1,3], index: 11, kind: input, shape index: {}]
  %s12 = inlined_call_operand.vmem [shape: f32[1,3], index: 12, kind: input, shape index: {}]
  %s13 = inlined_call_operand.vmem [shape: f32[128,12], index: 13, kind: output, shape index: {0}]
  %s14 = inlined_call_operand.hbm [shape: f32[32,12], index: 14, kind: output, shape index: {1}]
  %s15 = inlined_call_operand.vmem [shape: f32[32,4], index: 15, kind: output, shape index: {2}]
  %s16 = inlined_call_operand.vmem [shape: f32[2,3], index: 16, kind: output, shape index: {3}]
  %17 = xla_tuple %s13, %s14, %s15, %s16
  %s18 = sld [smem:[#allocation0]]
  $region86: #{waveletflow_forward.1} parent=0
    _
  %s20 = ssub.s32 1, %s18
  %s21 = scalar_select 0, %s20, %s18
  $region1: #{waveletflow_forward.1} parent=0
    #allocation2 [shape = 'u8[16384]{0}', space=vmem, size = 0x4000, scoped, tag = 'output window, operand 1, single buffered']
    #allocation3 [shape = 's32[1]{0}', space=sflag, size = 0x4, scoped, tag = 'scoped memory for waveletflow_forward.1']
    %22 = vsyncpa [#allocation3], 0
    // Predicated region
    $region2: #{waveletflow_forward.1} parent=1 // pred_check
      _
    $region3: #{waveletflow_forward.1} parent=1 // pred_check_branch
      %24 = sbr.rel (0) target = $region5
    $region4: #{waveletflow_forward.1} parent=1 // pred_region
      _
    $region5: #{waveletflow_forward.1} parent=1 // pred_fallthru
      _
    // Predicated region
    $region6: #{waveletflow_forward.1} parent=1 // pred_check
      _
    $region7: #{waveletflow_forward.1} parent=1 // pred_check_branch
      %26 = sbr.rel (0) target = $region9
    $region8: #{waveletflow_forward.1} parent=1 // pred_region
      _
    $region9: #{waveletflow_forward.1} parent=1 // pred_fallthru
      _
    // Predicated region
    $region10: #{waveletflow_forward.1} parent=1 // pred_check
      _
    $region11: #{waveletflow_forward.1} parent=1 // pred_check_branch
      %28 = sbr.rel (0) target = $region13
    $region12: #{waveletflow_forward.1} parent=1 // pred_region
      _
    $region13: #{waveletflow_forward.1} parent=1 // pred_fallthru
      _
    // Predicated region
    $region14: #{waveletflow_forward.1} parent=1 // pred_check
      _
    $region15: #{waveletflow_forward.1} parent=1 // pred_check_branch
      %30 = sbr.rel (0) target = $region17
    $region16: #{waveletflow_forward.1} parent=1 // pred_region
      _
    $region17: #{waveletflow_forward.1} parent=1 // pred_fallthru
      _
    // Predicated region
    $region18: #{waveletflow_forward.1} parent=1 // pred_check
      _
    $region19: #{waveletflow_forward.1} parent=1 // pred_check_branch
      %32 = sbr.rel (0) target = $region21
    $region20: #{waveletflow_forward.1} parent=1 // pred_region
      _
    $region21: #{waveletflow_forward.1} parent=1 // pred_fallthru
      _
    // Predicated region
    $region22: #{waveletflow_forward.1} parent=1 // pred_check
      _
    $region23: #{waveletflow_forward.1} parent=1 // pred_check_branch
      %34 = sbr.rel (0) target = $region25
    $region24: #{waveletflow_forward.1} parent=1 // pred_region
      _
    $region25: #{waveletflow_forward.1} parent=1 // pred_fallthru
      _
    // Predicated region
    $region26: #{waveletflow_forward.1} parent=1 // pred_check
      _
    $region27: #{waveletflow_forward.1} parent=1 // pred_check_branch
      %36 = sbr.rel (0) target = $region29
    $region28: #{waveletflow_forward.1} parent=1 // pred_region
      _
    $region29: #{waveletflow_forward.1} parent=1 // pred_fallthru
      _
    // Predicated region
    $region30: #{waveletflow_forward.1} parent=1 // pred_check
      _
    $region31: #{waveletflow_forward.1} parent=1 // pred_check_branch
      %38 = sbr.rel (0) target = $region33
    $region32: #{waveletflow_forward.1} parent=1 // pred_region
      _
    $region33: #{waveletflow_forward.1} parent=1 // pred_fallthru
      _
    // Predicated region
    $region34: #{waveletflow_forward.1} parent=1 // pred_check
      _
    $region35: #{waveletflow_forward.1} parent=1 // pred_check_branch
      %40 = sbr.rel (0) target = $region37
    $region36: #{waveletflow_forward.1} parent=1 // pred_region
      _
    $region37: #{waveletflow_forward.1} parent=1 // pred_fallthru
      _
    // Predicated region
    $region38: #{waveletflow_forward.1} parent=1 // pred_check
      _
    $region39: #{waveletflow_forward.1} parent=1 // pred_check_branch
      %42 = sbr.rel (0) target = $region41
    $region40: #{waveletflow_forward.1} parent=1 // pred_region
      _
    $region41: #{waveletflow_forward.1} parent=1 // pred_fallthru
      _
    // Predicated region
    $region42: #{waveletflow_forward.1} parent=1 // pred_check
      _
    $region43: #{waveletflow_forward.1} parent=1 // pred_check_branch
      %44 = sbr.rel (0) target = $region45
    $region44: #{waveletflow_forward.1} parent=1 // pred_region
      _
    $region45: #{waveletflow_forward.1} parent=1 // pred_fallthru
      _
    // Predicated region
    $region46: #{waveletflow_forward.1} parent=1 // pred_check
      _
    $region47: #{waveletflow_forward.1} parent=1 // pred_check_branch
      %46 = sbr.rel (0) target = $region49
    $region48: #{waveletflow_forward.1} parent=1 // pred_region
      _
    $region49: #{waveletflow_forward.1} parent=1 // pred_fallthru
      _
    // Predicated region
    $region50: #{waveletflow_forward.1} parent=1 // pred_check
      _
    $region51: #{waveletflow_forward.1} parent=1 // pred_check_branch
      %48 = sbr.rel (0) target = $region53
    $region52: #{waveletflow_forward.1} parent=1 // pred_region
      _
    $region53: #{waveletflow_forward.1} parent=1 // pred_fallthru
      _
    %v49 = vld [vmem:[%s0] sm:$0xff]
    %v50 = vld [vmem:[%s0 + $0x8] sm:$0xff]
    %v51 = vld [vmem:[%s0 + $0x10] sm:$0xff]
    %v52 = vld [vmem:[%s0 + $0x18] sm:$0xff]
    %v53 = vld [vmem:[%s0 + $0x20] sm:$0xff]
    %v54 = vld [vmem:[%s0 + $0x28] sm:$0xff]
    %v55 = vld [vmem:[%s0 + $0x30] sm:$0xff]
    %v56 = vld [vmem:[%s0 + $0x38] sm:$0xff]
    %v57 = vld [vmem:[%s0 + $0x40] sm:$0xff]
    %v58 = vld [vmem:[%s0 + $0x48] sm:$0xff]
    %v59 = vld [vmem:[%s0 + $0x50] sm:$0xff]
    %v60 = vld [vmem:[%s0 + $0x58] sm:$0xff]
    %v61 = vld [vmem:[%s0 + $0x60] sm:$0xff]
    %v62 = vld [vmem:[%s0 + $0x68] sm:$0xff]
    %v63 = vld [vmem:[%s0 + $0x70] sm:$0xff]
    %v64 = vld [vmem:[%s0 + $0x78] sm:$0xff]
    %v65 = vld [vmem:[%s1] sm:$0xff]
    %v66 = vld [vmem:[%s1 + $0x8] sm:$0xff]
    %vm67 = vcmask 130048
    %v69 = vsel %vm67, %v49, 0
    %v72 = vsel %vm67, %v50, 0
    %v75 = vsel %vm67, %v51, 0
    %v78 = vsel %vm67, %v52, 0
    %v81 = vsel %vm67, %v53, 0
    %v84 = vsel %vm67, %v54, 0
    %v87 = vsel %vm67, %v55, 0
    %v90 = vsel %vm67, %v56, 0
    %v93 = vsel %vm67, %v57, 0
    %v96 = vsel %vm67, %v58, 0
    %v99 = vsel %vm67, %v59, 0
    %v102 = vsel %vm67, %v60, 0
    %v105 = vsel %vm67, %v61, 0
    %v108 = vsel %vm67, %v62, 0
    %v111 = vsel %vm67, %v63, 0
    %v114 = vsel %vm67, %v64, 0
    %116 = vmatprep.subr.mxu0 0.0
    %117 = vmatpush1.msra.mxu0 0.0
    %118 = vmatprep.subr.mxu0 0.0
    %119 = vmatpush1.msra.mxu0 0.0
    %120 = vmatprep.subr.mxu0 0.0
    %121 = vmatpush1.msra.mxu0 0.0
    %122 = vmatprep.subr.mxu0 0.0
    %123 = vmatpush1.msra.mxu0 0.0
    %124 = vmatprep.subr.mxu0 0.0
    %125 = vmatpush1.msra.mxu0 0.0
    %126 = vmatprep.subr.mxu0 0.0
    %127 = vmatpush1.msra.mxu0 0.0
    %128 = vmatprep.subr.mxu0 0.0
    %129 = vmatpush1.msra.mxu0 0.0
    %130 = vmatprep.subr.mxu0 0.0
    %131 = vmatpush1.msra.mxu0 0.0
    %132 = vmatprep.subr.mxu0 0.0
    %133 = vmatpush1.msra.mxu0 0.0
    %134 = vmatprep.subr.mxu0 0.0
    %135 = vmatpush1.msra.mxu0 0.0
    %136 = vmatprep.subr.mxu0 0.0
    %137 = vmatpush1.msra.mxu0 0.0
    %138 = vmatprep.subr.mxu0 0.0
    %139 = vmatpush1.msra.mxu0 0.0
    %140 = vmatprep.subr.mxu0 0.0
    %141 = vmatpush1.msra.mxu0 0.0
    %142 = vmatprep.subr.mxu0 0.0
    %143 = vmatpush1.msra.mxu0 0.0
    %144 = vmatprep.subr.mxu0 0.0
    %145 = vmatpush1.msra.mxu0 %v66
    %146 = vmatprep.subr.mxu0 0.0
    %147 = vmatpush1.msra.mxu0 %v65
    %148 = vmatprep.subr.mxu0 0.0
    %149 = vmatpush2.msra.mxu0 0.0
    %150 = vmatprep.subr.mxu0 0.0
    %151 = vmatpush2.msra.mxu0 0.0
    %152 = vmatprep.subr.mxu0 0.0
    %153 = vmatpush2.msra.mxu0 0.0
    %154 = vmatprep.subr.mxu0 0.0
    %155 = vmatpush2.msra.mxu0 0.0
    %156 = vmatprep.subr.mxu0 0.0
    %157 = vmatpush2.msra.mxu0 0.0
    %158 = vmatprep.subr.mxu0 0.0
    %159 = vmatpush2.msra.mxu0 0.0
    %160 = vmatprep.subr.mxu0 0.0
    %161 = vmatpush2.msra.mxu0 0.0
    %162 = vmatprep.subr.mxu0 0.0
    %163 = vmatpush2.msra.mxu0 0.0
    %164 = vmatprep.subr.mxu0 0.0
    %165 = vmatpush2.msra.mxu0 0.0
    %166 = vmatprep.subr.mxu0 0.0
    %167 = vmatpush2.msra.mxu0 0.0
    %168 = vmatprep.subr.mxu0 0.0
    %169 = vmatpush2.msra.mxu0 0.0
    %170 = vmatprep.subr.mxu0 0.0
    %171 = vmatpush2.msra.mxu0 0.0
    %172 = vmatprep.subr.mxu0 0.0
    %173 = vmatpush2.msra.mxu0 0.0
    %174 = vmatprep.subr.mxu0 0.0
    %175 = vmatpush2.msra.mxu0 0.0
    %176 = vmatprep.subr.mxu0 0.0
    %177 = vmatpush2.msra.mxu0 0.0
    %178 = vmatprep.subr.mxu0 0.0
    %179 = vmatpush2.msra.mxu0 0.0
    %180 = vmatprep.mubr.f32.mxu0 0.0
    %181 = vmatmul.mubr.f32.gmra.mxu0 %v69
    %v182 = vpop.f32.mrf.mxu0
    %v183 = vadd.f32 0.0, %v182
    %v184 = vpop.f32.mrf.mxu0
    %185 = vmatprep.mubr.f32.mxu0 0.0
    %186 = vmatmul.mubr.f32.gmra.mxu0 %v72
    %v187 = vpop.f32.mrf.mxu0
    %v188 = vadd.f32 0.0, %v187
    %v189 = vpop.f32.mrf.mxu0
    %190 = vmatprep.mubr.f32.mxu0 0.0
    %191 = vmatmul.mubr.f32.gmra.mxu0 %v75
    %v192 = vpop.f32.mrf.mxu0
    %v193 = vadd.f32 0.0, %v192
    %v194 = vpop.f32.mrf.mxu0
    %195 = vmatprep.mubr.f32.mxu0 0.0
    %196 = vmatmul.mubr.f32.gmra.mxu0 %v78
    %v197 = vpop.f32.mrf.mxu0
    %v198 = vadd.f32 0.0, %v197
    %v199 = vpop.f32.mrf.mxu0
    %200 = vmatprep.mubr.f32.mxu0 0.0
    %201 = vmatmul.mubr.f32.gmra.mxu0 %v81
    %v202 = vpop.f32.mrf.mxu0
    %v203 = vadd.f32 0.0, %v202
    %v204 = vpop.f32.mrf.mxu0
    %205 = vmatprep.mubr.f32.mxu0 0.0
    %206 = vmatmul.mubr.f32.gmra.mxu0 %v84
    %v207 = vpop.f32.mrf.mxu0
    %v208 = vadd.f32 0.0, %v207
    %v209 = vpop.f32.mrf.mxu0
    %210 = vmatprep.mubr.f32.mxu0 0.0
    %211 = vmatmul.mubr.f32.gmra.mxu0 %v87
    %v212 = vpop.f32.mrf.mxu0
    %v213 = vadd.f32 0.0, %v212
    %v214 = vpop.f32.mrf.mxu0
    %215 = vmatprep.mubr.f32.mxu0 0.0
    %216 = vmatmul.mubr.f32.gmra.mxu0 %v90
    %v217 = vpop.f32.mrf.mxu0
    %v218 = vadd.f32 0.0, %v217
    %v219 = vpop.f32.mrf.mxu0
    %220 = vmatprep.mubr.f32.mxu0 0.0
    %221 = vmatmul.mubr.f32.gmra.mxu0 %v93
    %v222 = vpop.f32.mrf.mxu0
    %v223 = vadd.f32 0.0, %v222
    %v224 = vpop.f32.mrf.mxu0
    %225 = vmatprep.mubr.f32.mxu0 0.0
    %226 = vmatmul.mubr.f32.gmra.mxu0 %v96
    %v227 = vpop.f32.mrf.mxu0
    %v228 = vadd.f32 0.0, %v227
    %v229 = vpop.f32.mrf.mxu0
    %230 = vmatprep.mubr.f32.mxu0 0.0
    %231 = vmatmul.mubr.f32.gmra.mxu0 %v99
    %v232 = vpop.f32.mrf.mxu0
    %v233 = vadd.f32 0.0, %v232
    %v234 = vpop.f32.mrf.mxu0
    %235 = vmatprep.mubr.f32.mxu0 0.0
    %236 = vmatmul.mubr.f32.gmra.mxu0 %v102
    %v237 = vpop.f32.mrf.mxu0
    %v238 = vadd.f32 0.0, %v237
    %v239 = vpop.f32.mrf.mxu0
    %240 = vmatprep.mubr.f32.mxu0 0.0
    %241 = vmatmul.mubr.f32.gmra.mxu0 %v105
    %v242 = vpop.f32.mrf.mxu0
    %v243 = vadd.f32 0.0, %v242
    %v244 = vpop.f32.mrf.mxu0
    %245 = vmatprep.mubr.f32.mxu0 0.0
    %246 = vmatmul.mubr.f32.gmra.mxu0 %v108
    %v247 = vpop.f32.mrf.mxu0
    %v248 = vadd.f32 0.0, %v247
    %v249 = vpop.f32.mrf.mxu0
    %250 = vmatprep.mubr.f32.mxu0 0.0
    %251 = vmatmul.mubr.f32.gmra.mxu0 %v111
    %v252 = vpop.f32.mrf.mxu0
    %v253 = vadd.f32 0.0, %v252
    %v254 = vpop.f32.mrf.mxu0
    %255 = vmatprep.mubr.f32.mxu0 0.0
    %256 = vmatmul.mubr.f32.gmra.mxu0 %v114
    %v257 = vpop.f32.mrf.mxu0
    %v258 = vadd.f32 0.0, %v257
    %v259 = vpop.f32.mrf.mxu0
    %260 = vdwg.mxu0
    %v261 = vld [vmem:[%s3] sm:$0x1]
    %v263 = vlaneseq
    %v264 = vshrl.u32 %v263, 7
    %v265 = vsub.s32 0, %v264
    %v266 = vrot.slane %v261, %v265
    %267 = vrot.lane.b32.xlu0 %v266, 16
    %v268 = vpop.permute.xlu0 %267
    %v270 = vadd.f32 %v183, %v268
    %v271 = vadd.f32 %v188, %v268
    %v272 = vadd.f32 %v193, %v268
    %v273 = vadd.f32 %v198, %v268
    %v274 = vadd.f32 %v203, %v268
    %v275 = vadd.f32 %v208, %v268
    %v276 = vadd.f32 %v213, %v268
    %v277 = vadd.f32 %v218, %v268
    %v278 = vadd.f32 %v223, %v268
    %v279 = vadd.f32 %v228, %v268
    %v280 = vadd.f32 %v233, %v268
    %v281 = vadd.f32 %v238, %v268
    %v282 = vadd.f32 %v243, %v268
    %v283 = vadd.f32 %v248, %v268
    %v284 = vadd.f32 %v253, %v268
    %v285 = vadd.f32 %v258, %v268
    %v286 = vmax.f32 %v270, 0.0
    %v287 = vmax.f32 %v271, 0.0
    %v288 = vmax.f32 %v272, 0.0
    %v289 = vmax.f32 %v273, 0.0
    %v290 = vmax.f32 %v274, 0.0
    %v291 = vmax.f32 %v275, 0.0
    %v292 = vmax.f32 %v276, 0.0
    %v293 = vmax.f32 %v277, 0.0
    %v294 = vmax.f32 %v278, 0.0
    %v295 = vmax.f32 %v279, 0.0
    %v296 = vmax.f32 %v280, 0.0
    %v297 = vmax.f32 %v281, 0.0
    %v298 = vmax.f32 %v282, 0.0
    %v299 = vmax.f32 %v283, 0.0
    %v300 = vmax.f32 %v284, 0.0
    %v301 = vmax.f32 %v285, 0.0
    %v302 = vld [vmem:[%s2] sm:$0xff]
    %319 = vrot.lane.b32.xlu0 %v286, 112
    %v320 = vpop.permute.xlu0 %319
    %321 = vrot.lane.b32.xlu0 %v287, 112
    %v322 = vpop.permute.xlu0 %321
    %323 = vrot.lane.b32.xlu0 %v288, 112
    %v324 = vpop.permute.xlu0 %323
    %325 = vrot.lane.b32.xlu0 %v289, 112
    %v326 = vpop.permute.xlu0 %325
    %327 = vrot.lane.b32.xlu0 %v290, 112
    %v328 = vpop.permute.xlu0 %327
    %329 = vrot.lane.b32.xlu0 %v291, 112
    %v330 = vpop.permute.xlu0 %329
    %331 = vrot.lane.b32.xlu0 %v292, 112
    %v332 = vpop.permute.xlu0 %331
    %333 = vrot.lane.b32.xlu0 %v293, 112
    %v334 = vpop.permute.xlu0 %333
    %335 = vrot.lane.b32.xlu0 %v294, 112
    %v336 = vpop.permute.xlu0 %335
    %337 = vrot.lane.b32.xlu0 %v295, 112
    %v338 = vpop.permute.xlu0 %337
    %339 = vrot.lane.b32.xlu0 %v296, 112
    %v340 = vpop.permute.xlu0 %339
    %341 = vrot.lane.b32.xlu0 %v297, 112
    %v342 = vpop.permute.xlu0 %341
    %343 = vrot.lane.b32.xlu0 %v298, 112
    %v344 = vpop.permute.xlu0 %343
    %345 = vrot.lane.b32.xlu0 %v299, 112
    %v346 = vpop.permute.xlu0 %345
    %347 = vrot.lane.b32.xlu0 %v300, 112
    %v348 = vpop.permute.xlu0 %347
    %349 = vrot.lane.b32.xlu0 %v301, 112
    %v350 = vpop.permute.xlu0 %349
    %vm351 = vcmask 64512
    %v352 = vsel %vm351, %v320, 0
    %v354 = vsel %vm351, %v322, 0
    %v356 = vsel %vm351, %v324, 0
    %v358 = vsel %vm351, %v326, 0
    %v360 = vsel %vm351, %v328, 0
    %v362 = vsel %vm351, %v330, 0
    %v364 = vsel %vm351, %v332, 0
    %v366 = vsel %vm351, %v334, 0
    %v368 = vsel %vm351, %v336, 0
    %v370 = vsel %vm351, %v338, 0
    %v372 = vsel %vm351, %v340, 0
    %v374 = vsel %vm351, %v342, 0
    %v376 = vsel %vm351, %v344, 0
    %v378 = vsel %vm351, %v346, 0
    %v380 = vsel %vm351, %v348, 0
    %v382 = vsel %vm351, %v350, 0
    %384 = vmatprep.subr.mxu0 0.0
    %385 = vmatpush1.msra.mxu0 0.0
    %386 = vmatprep.subr.mxu0 0.0
    %387 = vmatpush1.msra.mxu0 0.0
    %388 = vmatprep.subr.mxu0 0.0
    %389 = vmatpush1.msra.mxu0 0.0
    %390 = vmatprep.subr.mxu0 0.0
    %391 = vmatpush1.msra.mxu0 0.0
    %392 = vmatprep.subr.mxu0 0.0
    %393 = vmatpush1.msra.mxu0 0.0
    %394 = vmatprep.subr.mxu0 0.0
    %395 = vmatpush1.msra.mxu0 0.0
    %396 = vmatprep.subr.mxu0 0.0
    %397 = vmatpush1.msra.mxu0 0.0
    %398 = vmatprep.subr.mxu0 0.0
    %399 = vmatpush1.msra.mxu0 0.0
    %400 = vmatprep.subr.mxu0 0.0
    %401 = vmatpush1.msra.mxu0 0.0
    %402 = vmatprep.subr.mxu0 0.0
    %403 = vmatpush1.msra.mxu0 0.0
    %404 = vmatprep.subr.mxu0 0.0
    %405 = vmatpush1.msra.mxu0 0.0
    %406 = vmatprep.subr.mxu0 0.0
    %407 = vmatpush1.msra.mxu0 0.0
    %408 = vmatprep.subr.mxu0 0.0
    %409 = vmatpush1.msra.mxu0 0.0
    %410 = vmatprep.subr.mxu0 0.0
    %411 = vmatpush1.msra.mxu0 0.0
    %412 = vmatprep.subr.mxu0 0.0
    %413 = vmatpush1.msra.mxu0 0.0
    %414 = vmatprep.subr.mxu0 0.0
    %415 = vmatpush1.msra.mxu0 %v302
    %416 = vmatprep.subr.mxu0 0.0
    %417 = vmatpush2.msra.mxu0 0.0
    %418 = vmatprep.subr.mxu0 0.0
    %419 = vmatpush2.msra.mxu0 0.0
    %420 = vmatprep.subr.mxu0 0.0
    %421 = vmatpush2.msra.mxu0 0.0
    %422 = vmatprep.subr.mxu0 0.0
    %423 = vmatpush2.msra.mxu0 0.0
    %424 = vmatprep.subr.mxu0 0.0
    %425 = vmatpush2.msra.mxu0 0.0
    %426 = vmatprep.subr.mxu0 0.0
    %427 = vmatpush2.msra.mxu0 0.0
    %428 = vmatprep.subr.mxu0 0.0
    %429 = vmatpush2.msra.mxu0 0.0
    %430 = vmatprep.subr.mxu0 0.0
    %431 = vmatpush2.msra.mxu0 0.0
    %432 = vmatprep.subr.mxu0 0.0
    %433 = vmatpush2.msra.mxu0 0.0
    %434 = vmatprep.subr.mxu0 0.0
    %435 = vmatpush2.msra.mxu0 0.0
    %436 = vmatprep.subr.mxu0 0.0
    %437 = vmatpush2.msra.mxu0 0.0
    %438 = vmatprep.subr.mxu0 0.0
    %439 = vmatpush2.msra.mxu0 0.0
    %440 = vmatprep.subr.mxu0 0.0
    %441 = vmatpush2.msra.mxu0 0.0
    %442 = vmatprep.subr.mxu0 0.0
    %443 = vmatpush2.msra.mxu0 0.0
    %444 = vmatprep.subr.mxu0 0.0
    %445 = vmatpush2.msra.mxu0 0.0
    %446 = vmatprep.subr.mxu0 0.0
    %447 = vmatpush2.msra.mxu0 0.0
    %448 = vmatprep.mubr.f32.mxu0 0.0
    %449 = vmatmul.mubr.f32.gmra.mxu0 %v352
    %v450 = vpop.f32.mrf.mxu0
    %v451 = vadd.f32 0.0, %v450
    %v452 = vpop.f32.mrf.mxu0
    %453 = vmatprep.mubr.f32.mxu0 0.0
    %454 = vmatmul.mubr.f32.gmra.mxu0 %v354
    %v455 = vpop.f32.mrf.mxu0
    %v456 = vadd.f32 0.0, %v455
    %v457 = vpop.f32.mrf.mxu0
    %458 = vmatprep.mubr.f32.mxu0 0.0
    %459 = vmatmul.mubr.f32.gmra.mxu0 %v356
    %v460 = vpop.f32.mrf.mxu0
    %v461 = vadd.f32 0.0, %v460
    %v462 = vpop.f32.mrf.mxu0
    %463 = vmatprep.mubr.f32.mxu0 0.0
    %464 = vmatmul.mubr.f32.gmra.mxu0 %v358
    %v465 = vpop.f32.mrf.mxu0
    %v466 = vadd.f32 0.0, %v465
    %v467 = vpop.f32.mrf.mxu0
    %468 = vmatprep.mubr.f32.mxu0 0.0
    %469 = vmatmul.mubr.f32.gmra.mxu0 %v360
    %v470 = vpop.f32.mrf.mxu0
    %v471 = vadd.f32 0.0, %v470
    %v472 = vpop.f32.mrf.mxu0
    %473 = vmatprep.mubr.f32.mxu0 0.0
    %474 = vmatmul.mubr.f32.gmra.mxu0 %v362
    %v475 = vpop.f32.mrf.mxu0
    %v476 = vadd.f32 0.0, %v475
    %v477 = vpop.f32.mrf.mxu0
    %478 = vmatprep.mubr.f32.mxu0 0.0
    %479 = vmatmul.mubr.f32.gmra.mxu0 %v364
    %v480 = vpop.f32.mrf.mxu0
    %v481 = vadd.f32 0.0, %v480
    %v482 = vpop.f32.mrf.mxu0
    %483 = vmatprep.mubr.f32.mxu0 0.0
    %484 = vmatmul.mubr.f32.gmra.mxu0 %v366
    %v485 = vpop.f32.mrf.mxu0
    %v486 = vadd.f32 0.0, %v485
    %v487 = vpop.f32.mrf.mxu0
    %488 = vmatprep.mubr.f32.mxu0 0.0
    %489 = vmatmul.mubr.f32.gmra.mxu0 %v368
    %v490 = vpop.f32.mrf.mxu0
    %v491 = vadd.f32 0.0, %v490
    %v492 = vpop.f32.mrf.mxu0
    %493 = vmatprep.mubr.f32.mxu0 0.0
    %494 = vmatmul.mubr.f32.gmra.mxu0 %v370
    %v495 = vpop.f32.mrf.mxu0
    %v496 = vadd.f32 0.0, %v495
    %v497 = vpop.f32.mrf.mxu0
    %498 = vmatprep.mubr.f32.mxu0 0.0
    %499 = vmatmul.mubr.f32.gmra.mxu0 %v372
    %v500 = vpop.f32.mrf.mxu0
    %v501 = vadd.f32 0.0, %v500
    %v502 = vpop.f32.mrf.mxu0
    %503 = vmatprep.mubr.f32.mxu0 0.0
    %504 = vmatmul.mubr.f32.gmra.mxu0 %v374
    %v505 = vpop.f32.mrf.mxu0
    %v506 = vadd.f32 0.0, %v505
    %v507 = vpop.f32.mrf.mxu0
    %508 = vmatprep.mubr.f32.mxu0 0.0
    %509 = vmatmul.mubr.f32.gmra.mxu0 %v376
    %v510 = vpop.f32.mrf.mxu0
    %v511 = vadd.f32 0.0, %v510
    %v512 = vpop.f32.mrf.mxu0
    %513 = vmatprep.mubr.f32.mxu0 0.0
    %514 = vmatmul.mubr.f32.gmra.mxu0 %v378
    %v515 = vpop.f32.mrf.mxu0
    %v516 = vadd.f32 0.0, %v515
    %v517 = vpop.f32.mrf.mxu0
    %518 = vmatprep.mubr.f32.mxu0 0.0
    %519 = vmatmul.mubr.f32.gmra.mxu0 %v380
    %v520 = vpop.f32.mrf.mxu0
    %v521 = vadd.f32 0.0, %v520
    %v522 = vpop.f32.mrf.mxu0
    %523 = vmatprep.mubr.f32.mxu0 0.0
    %524 = vmatmul.mubr.f32.gmra.mxu0 %v382
    %v525 = vpop.f32.mrf.mxu0
    %v526 = vadd.f32 0.0, %v525
    %v527 = vpop.f32.mrf.mxu0
    %528 = vdwg.mxu0
    %545 = vrot.lane.b32.xlu0 %v451, 4
    %v546 = vpop.permute.xlu0 %545
    %547 = vrot.lane.b32.xlu0 %v456, 4
    %v548 = vpop.permute.xlu0 %547
    %549 = vrot.lane.b32.xlu0 %v461, 4
    %v550 = vpop.permute.xlu0 %549
    %551 = vrot.lane.b32.xlu0 %v466, 4
    %v552 = vpop.permute.xlu0 %551
    %553 = vrot.lane.b32.xlu0 %v471, 4
    %v554 = vpop.permute.xlu0 %553
    %555 = vrot.lane.b32.xlu0 %v476, 4
    %v556 = vpop.permute.xlu0 %555
    %557 = vrot.lane.b32.xlu0 %v481, 4
    %v558 = vpop.permute.xlu0 %557
    %559 = vrot.lane.b32.xlu0 %v486, 4
    %v560 = vpop.permute.xlu0 %559
    %561 = vrot.lane.b32.xlu0 %v491, 4
    %v562 = vpop.permute.xlu0 %561
    %563 = vrot.lane.b32.xlu0 %v496, 4
    %v564 = vpop.permute.xlu0 %563
    %565 = vrot.lane.b32.xlu0 %v501, 4
    %v566 = vpop.permute.xlu0 %565
    %567 = vrot.lane.b32.xlu0 %v506, 4
    %v568 = vpop.permute.xlu0 %567
    %569 = vrot.lane.b32.xlu0 %v511, 4
    %v570 = vpop.permute.xlu0 %569
    %571 = vrot.lane.b32.xlu0 %v516, 4
    %v572 = vpop.permute.xlu0 %571
    %573 = vrot.lane.b32.xlu0 %v521, 4
    %v574 = vpop.permute.xlu0 %573
    %575 = vrot.lane.b32.xlu0 %v526, 4
    %v576 = vpop.permute.xlu0 %575
    %v593 = vadd.f32 %v183, %v546
    %v594 = vadd.f32 %v188, %v548
    %v595 = vadd.f32 %v193, %v550
    %v596 = vadd.f32 %v198, %v552
    %v597 = vadd.f32 %v203, %v554
    %v598 = vadd.f32 %v208, %v556
    %v599 = vadd.f32 %v213, %v558
    %v600 = vadd.f32 %v218, %v560
    %v601 = vadd.f32 %v223, %v562
    %v602 = vadd.f32 %v228, %v564
    %v603 = vadd.f32 %v233, %v566
    %v604 = vadd.f32 %v238, %v568
    %v605 = vadd.f32 %v243, %v570
    %v606 = vadd.f32 %v248, %v572
    %v607 = vadd.f32 %v253, %v574
    %v608 = vadd.f32 %v258, %v576
    %609 = vrot.lane.b32.xlu0 %v266, 124
    %v610 = vpop.permute.xlu0 %609
    %v612 = vmul.f32 %v593, %v610
    %v613 = vmul.f32 %v594, %v610
    %v614 = vmul.f32 %v595, %v610
    %v615 = vmul.f32 %v596, %v610
    %v616 = vmul.f32 %v597, %v610
    %v617 = vmul.f32 %v598, %v610
    %v618 = vmul.f32 %v599, %v610
    %v619 = vmul.f32 %v600, %v610
    %v620 = vmul.f32 %v601, %v610
    %v621 = vmul.f32 %v602, %v610
    %v622 = vmul.f32 %v603, %v610
    %v623 = vmul.f32 %v604, %v610
    %v624 = vmul.f32 %v605, %v610
    %v625 = vmul.f32 %v606, %v610
    %v626 = vmul.f32 %v607, %v610
    %v627 = vmul.f32 %v608, %v610
    %628 = vrot.lane.b32.xlu0 %v266, 112
    %v629 = vpop.permute.xlu0 %628
    %v631 = vadd.f32 %v612, %v629
    %v632 = vadd.f32 %v613, %v629
    %v633 = vadd.f32 %v614, %v629
    %v634 = vadd.f32 %v615, %v629
    %v635 = vadd.f32 %v616, %v629
    %v636 = vadd.f32 %v617, %v629
    %v637 = vadd.f32 %v618, %v629
    %v638 = vadd.f32 %v619, %v629
    %v639 = vadd.f32 %v620, %v629
    %v640 = vadd.f32 %v621, %v629
    %v641 = vadd.f32 %v622, %v629
    %v642 = vadd.f32 %v623, %v629
    %v643 = vadd.f32 %v624, %v629
    %v644 = vadd.f32 %v625, %v629
    %v645 = vadd.f32 %v626, %v629
    %v646 = vadd.f32 %v627, %v629
    %663 = vrot.lane.b32.xlu0 %v631, 124
    %v664 = vpop.permute.xlu0 %663
    %665 = vrot.lane.b32.xlu0 %v632, 124
    %v666 = vpop.permute.xlu0 %665
    %667 = vrot.lane.b32.xlu0 %v633, 124
    %v668 = vpop.permute.xlu0 %667
    %669 = vrot.lane.b32.xlu0 %v634, 124
    %v670 = vpop.permute.xlu0 %669
    %671 = vrot.lane.b32.xlu0 %v635, 124
    %v672 = vpop.permute.xlu0 %671
    %673 = vrot.lane.b32.xlu0 %v636, 124
    %v674 = vpop.permute.xlu0 %673
    %675 = vrot.lane.b32.xlu0 %v637, 124
    %v676 = vpop.permute.xlu0 %675
    %677 = vrot.lane.b32.xlu0 %v638, 124
    %v678 = vpop.permute.xlu0 %677
    %679 = vrot.lane.b32.xlu0 %v639, 124
    %v680 = vpop.permute.xlu0 %679
    %681 = vrot.lane.b32.xlu0 %v640, 124
    %v682 = vpop.permute.xlu0 %681
    %683 = vrot.lane.b32.xlu0 %v641, 124
    %v684 = vpop.permute.xlu0 %683
    %685 = vrot.lane.b32.xlu0 %v642, 124
    %v686 = vpop.permute.xlu0 %685
    %687 = vrot.lane.b32.xlu0 %v643, 124
    %v688 = vpop.permute.xlu0 %687
    %689 = vrot.lane.b32.xlu0 %v644, 124
    %v690 = vpop.permute.xlu0 %689
    %691 = vrot.lane.b32.xlu0 %v645, 124
    %v692 = vpop.permute.xlu0 %691
    %693 = vrot.lane.b32.xlu0 %v646, 124
    %v694 = vpop.permute.xlu0 %693
    %vm711 = vcmask 97280
    %712 = vst.msk [vmem:[%s13] sm:$0xff] %vm711, %v664
    %713 = vst.msk [vmem:[%s13 + $0x8] sm:$0xff] %vm711, %v666
    %714 = vst.msk [vmem:[%s13 + $0x10] sm:$0xff] %vm711, %v668
    %715 = vst.msk [vmem:[%s13 + $0x18] sm:$0xff] %vm711, %v670
    %716 = vst.msk [vmem:[%s13 + $0x20] sm:$0xff] %vm711, %v672
    %717 = vst.msk [vmem:[%s13 + $0x28] sm:$0xff] %vm711, %v674
    %718 = vst.msk [vmem:[%s13 + $0x30] sm:$0xff] %vm711, %v676
    %719 = vst.msk [vmem:[%s13 + $0x38] sm:$0xff] %vm711, %v678
    %720 = vst.msk [vmem:[%s13 + $0x40] sm:$0xff] %vm711, %v680
    %721 = vst.msk [vmem:[%s13 + $0x48] sm:$0xff] %vm711, %v682
    %722 = vst.msk [vmem:[%s13 + $0x50] sm:$0xff] %vm711, %v684
    %723 = vst.msk [vmem:[%s13 + $0x58] sm:$0xff] %vm711, %v686
    %724 = vst.msk [vmem:[%s13 + $0x60] sm:$0xff] %vm711, %v688
    %725 = vst.msk [vmem:[%s13 + $0x68] sm:$0xff] %vm711, %v690
    %726 = vst.msk [vmem:[%s13 + $0x70] sm:$0xff] %vm711, %v692
    %727 = vst.msk [vmem:[%s13 + $0x78] sm:$0xff] %vm711, %v694
    %v728 = vld [vmem:[%s7] sm:$0xff]
    %v729 = vld [vmem:[%s7 + $0x8] sm:$0xff]
    %v730 = vld [vmem:[%s7 + $0x10] sm:$0xff]
    %v731 = vld [vmem:[%s7 + $0x18] sm:$0xff]
    %v732 = vld [vmem:[%s7 + $0x20] sm:$0xff]
    %v733 = vld [vmem:[%s7 + $0x28] sm:$0xff]
    %v734 = vld [vmem:[%s7 + $0x30] sm:$0xff]
    %v735 = vld [vmem:[%s7 + $0x38] sm:$0xff]
    %v736 = vld [vmem:[%s7 + $0x40] sm:$0xff]
    %v737 = vld [vmem:[%s7 + $0x48] sm:$0xff]
    %v738 = vld [vmem:[%s7 + $0x50] sm:$0xff]
    %v739 = vld [vmem:[%s7 + $0x58] sm:$0xff]
    %v740 = vld [vmem:[%s7 + $0x60] sm:$0xff]
    %v741 = vld [vmem:[%s7 + $0x68] sm:$0xff]
    %v742 = vld [vmem:[%s7 + $0x70] sm:$0xff]
    %v743 = vld [vmem:[%s7 + $0x78] sm:$0xff]
    %744 = vmatprep.subr.mxu0 0.0
    %745 = vmatpush1.msra.mxu0 %v258
    %746 = vmatprep.subr.mxu0 0.0
    %747 = vmatpush1.msra.mxu0 %v253
    %748 = vmatprep.subr.mxu0 0.0
    %749 = vmatpush1.msra.mxu0 %v248
    %750 = vmatprep.subr.mxu0 0.0
    %751 = vmatpush1.msra.mxu0 %v243
    %752 = vmatprep.subr.mxu0 0.0
    %753 = vmatpush1.msra.mxu0 %v238
    %754 = vmatprep.subr.mxu0 0.0
    %755 = vmatpush1.msra.mxu0 %v233
    %756 = vmatprep.subr.mxu0 0.0
    %757 = vmatpush1.msra.mxu0 %v228
    %758 = vmatprep.subr.mxu0 0.0
    %759 = vmatpush1.msra.mxu0 %v223
    %760 = vmatprep.subr.mxu0 0.0
    %761 = vmatpush1.msra.mxu0 %v218
    %762 = vmatprep.subr.mxu0 0.0
    %763 = vmatpush1.msra.mxu0 %v213
    %764 = vmatprep.subr.mxu0 0.0
    %765 = vmatpush1.msra.mxu0 %v208
    %766 = vmatprep.subr.mxu0 0.0
    %767 = vmatpush1.msra.mxu0 %v203
    %768 = vmatprep.subr.mxu0 0.0
    %769 = vmatpush1.msra.mxu0 %v198
    %770 = vmatprep.subr.mxu0 0.0
    %771 = vmatpush1.msra.mxu0 %v193
    %772 = vmatprep.subr.mxu0 0.0
    %773 = vmatpush1.msra.mxu0 %v188
    %774 = vmatprep.subr.mxu0 0.0
    %775 = vmatpush1.msra.mxu0 %v183
    %776 = vmatprep.subr.mxu0 0.0
    %777 = vmatpush2.msra.mxu0 0.0
    %778 = vmatprep.subr.mxu0 0.0
    %779 = vmatpush2.msra.mxu0 0.0
    %780 = vmatprep.subr.mxu0 0.0
    %781 = vmatpush2.msra.mxu0 0.0
    %782 = vmatprep.subr.mxu0 0.0
    %783 = vmatpush2.msra.mxu0 0.0
    %784 = vmatprep.subr.mxu0 0.0
    %785 = vmatpush2.msra.mxu0 0.0
    %786 = vmatprep.subr.mxu0 0.0
    %787 = vmatpush2.msra.mxu0 0.0
    %788 = vmatprep.subr.mxu0 0.0
    %789 = vmatpush2.msra.mxu0 0.0
    %790 = vmatprep.subr.mxu0 0.0
    %791 = vmatpush2.msra.mxu0 0.0
    %792 = vmatprep.subr.mxu0 0.0
    %793 = vmatpush2.msra.mxu0 0.0
    %794 = vmatprep.subr.mxu0 0.0
    %795 = vmatpush2.msra.mxu0 0.0
    %796 = vmatprep.subr.mxu0 0.0
    %797 = vmatpush2.msra.mxu0 0.0
    %798 = vmatprep.subr.mxu0 0.0
    %799 = vmatpush2.msra.mxu0 0.0
    %800 = vmatprep.subr.mxu0 0.0
    %801 = vmatpush2.msra.mxu0 0.0
    %802 = vmatprep.subr.mxu0 0.0
    %803 = vmatpush2.msra.mxu0 0.0
    %804 = vmatprep.subr.mxu0 0.0
    %805 = vmatpush2.msra.mxu0 0.0
    %806 = vmatprep.subr.mxu0 0.0
    %807 = vmatpush2.msra.mxu0 0.0
    %808 = vmatprep.mubr.f32.mxu0 0.0
    %809 = vmatmul.mubr.f32.gmra.mxu0 %v728
    %v810 = vpop.f32.mrf.mxu0
    %v811 = vadd.f32 0.0, %v810
    %v812 = vpop.f32.mrf.mxu0
    %813 = vmatprep.mubr.f32.mxu0 0.0
    %814 = vmatmul.mubr.f32.gmra.mxu0 %v729
    %v815 = vpop.f32.mrf.mxu0
    %v816 = vadd.f32 0.0, %v815
    %v817 = vpop.f32.mrf.mxu0
    %818 = vmatprep.mubr.f32.mxu0 0.0
    %819 = vmatmul.mubr.f32.gmra.mxu0 %v730
    %v820 = vpop.f32.mrf.mxu0
    %v821 = vadd.f32 0.0, %v820
    %v822 = vpop.f32.mrf.mxu0
    %823 = vmatprep.mubr.f32.mxu0 0.0
    %824 = vmatmul.mubr.f32.gmra.mxu0 %v731
    %v825 = vpop.f32.mrf.mxu0
    %v826 = vadd.f32 0.0, %v825
    %v827 = vpop.f32.mrf.mxu0
    %828 = vdwg.mxu0
    %829 = vmatprep.subr.mxu0 0.0
    %830 = vmatpush1.msra.mxu0 %v258
    %831 = vmatprep.subr.mxu0 0.0
    %832 = vmatpush1.msra.mxu0 %v253
    %833 = vmatprep.subr.mxu0 0.0
    %834 = vmatpush1.msra.mxu0 %v248
    %835 = vmatprep.subr.mxu0 0.0
    %836 = vmatpush1.msra.mxu0 %v243
    %837 = vmatprep.subr.mxu0 0.0
    %838 = vmatpush1.msra.mxu0 %v238
    %839 = vmatprep.subr.mxu0 0.0
    %840 = vmatpush1.msra.mxu0 %v233
    %841 = vmatprep.subr.mxu0 0.0
    %842 = vmatpush1.msra.mxu0 %v228
    %843 = vmatprep.subr.mxu0 0.0
    %844 = vmatpush1.msra.mxu0 %v223
    %845 = vmatprep.subr.mxu0 0.0
    %846 = vmatpush1.msra.mxu0 %v218
    %847 = vmatprep.subr.mxu0 0.0
    %848 = vmatpush1.msra.mxu0 %v213
    %849 = vmatprep.subr.mxu0 0.0
    %850 = vmatpush1.msra.mxu0 %v208
    %851 = vmatprep.subr.mxu0 0.0
    %852 = vmatpush1.msra.mxu0 %v203
    %853 = vmatprep.subr.mxu0 0.0
    %854 = vmatpush1.msra.mxu0 %v198
    %855 = vmatprep.subr.mxu0 0.0
    %856 = vmatpush1.msra.mxu0 %v193
    %857 = vmatprep.subr.mxu0 0.0
    %858 = vmatpush1.msra.mxu0 %v188
    %859 = vmatprep.subr.mxu0 0.0
    %860 = vmatpush1.msra.mxu0 %v183
    %861 = vmatprep.subr.mxu0 0.0
    %862 = vmatpush2.msra.mxu0 0.0
    %863 = vmatprep.subr.mxu0 0.0
    %864 = vmatpush2.msra.mxu0 0.0
    %865 = vmatprep.subr.mxu0 0.0
    %866 = vmatpush2.msra.mxu0 0.0
    %867 = vmatprep.subr.mxu0 0.0
    %868 = vmatpush2.msra.mxu0 0.0
    %869 = vmatprep.subr.mxu0 0.0
    %870 = vmatpush2.msra.mxu0 0.0
    %871 = vmatprep.subr.mxu0 0.0
    %872 = vmatpush2.msra.mxu0 0.0
    %873 = vmatprep.subr.mxu0 0.0
    %874 = vmatpush2.msra.mxu0 0.0
    %875 = vmatprep.subr.mxu0 0.0
    %876 = vmatpush2.msra.mxu0 0.0
    %877 = vmatprep.subr.mxu0 0.0
    %878 = vmatpush2.msra.mxu0 0.0
    %879 = vmatprep.subr.mxu0 0.0
    %880 = vmatpush2.msra.mxu0 0.0
    %881 = vmatprep.subr.mxu0 0.0
    %882 = vmatpush2.msra.mxu0 0.0
    %883 = vmatprep.subr.mxu0 0.0
    %884 = vmatpush2.msra.mxu0 0.0
    %885 = vmatprep.subr.mxu0 0.0
    %886 = vmatpush2.msra.mxu0 0.0
    %887 = vmatprep.subr.mxu0 0.0
    %888 = vmatpush2.msra.mxu0 0.0
    %889 = vmatprep.subr.mxu0 0.0
    %890 = vmatpush2.msra.mxu0 0.0
    %891 = vmatprep.subr.mxu0 0.0
    %892 = vmatpush2.msra.mxu0 0.0
    %893 = vmatprep.mubr.f32.mxu0 0.0
    %894 = vmatmul.mubr.f32.gmra.mxu0 %v732
    %v895 = vpop.f32.mrf.mxu0
    %v896 = vadd.f32 0.0, %v895
    %v897 = vpop.f32.mrf.mxu0
    %898 = vmatprep.mubr.f32.mxu0 0.0
    %899 = vmatmul.mubr.f32.gmra.mxu0 %v733
    %v900 = vpop.f32.mrf.mxu0
    %v901 = vadd.f32 0.0, %v900
    %v902 = vpop.f32.mrf.mxu0
    %903 = vmatprep.mubr.f32.mxu0 0.0
    %904 = vmatmul.mubr.f32.gmra.mxu0 %v734
    %v905 = vpop.f32.mrf.mxu0
    %v906 = vadd.f32 0.0, %v905
    %v907 = vpop.f32.mrf.mxu0
    %908 = vmatprep.mubr.f32.mxu0 0.0
    %909 = vmatmul.mubr.f32.gmra.mxu0 %v735
    %v910 = vpop.f32.mrf.mxu0
    %v911 = vadd.f32 0.0, %v910
    %v912 = vpop.f32.mrf.mxu0
    %913 = vdwg.mxu0
    %914 = vmatprep.subr.mxu0 0.0
    %915 = vmatpush1.msra.mxu0 %v258
    %916 = vmatprep.subr.mxu0 0.0
    %917 = vmatpush1.msra.mxu0 %v253
    %918 = vmatprep.subr.mxu0 0.0
    %919 = vmatpush1.msra.mxu0 %v248
    %920 = vmatprep.subr.mxu0 0.0
    %921 = vmatpush1.msra.mxu0 %v243
    %922 = vmatprep.subr.mxu0 0.0
    %923 = vmatpush1.msra.mxu0 %v238
    %924 = vmatprep.subr.mxu0 0.0
    %925 = vmatpush1.msra.mxu0 %v233
    %926 = vmatprep.subr.mxu0 0.0
    %927 = vmatpush1.msra.mxu0 %v228
    %928 = vmatprep.subr.mxu0 0.0
    %929 = vmatpush1.msra.mxu0 %v223
    %930 = vmatprep.subr.mxu0 0.0
    %931 = vmatpush1.msra.mxu0 %v218
    %932 = vmatprep.subr.mxu0 0.0
    %933 = vmatpush1.msra.mxu0 %v213
    %934 = vmatprep.subr.mxu0 0.0
    %935 = vmatpush1.msra.mxu0 %v208
    %936 = vmatprep.subr.mxu0 0.0
    %937 = vmatpush1.msra.mxu0 %v203
    %938 = vmatprep.subr.mxu0 0.0
    %939 = vmatpush1.msra.mxu0 %v198
    %940 = vmatprep.subr.mxu0 0.0
    %941 = vmatpush1.msra.mxu0 %v193
    %942 = vmatprep.subr.mxu0 0.0
    %943 = vmatpush1.msra.mxu0 %v188
    %944 = vmatprep.subr.mxu0 0.0
    %945 = vmatpush1.msra.mxu0 %v183
    %946 = vmatprep.subr.mxu0 0.0
    %947 = vmatpush2.msra.mxu0 0.0
    %948 = vmatprep.subr.mxu0 0.0
    %949 = vmatpush2.msra.mxu0 0.0
    %950 = vmatprep.subr.mxu0 0.0
    %951 = vmatpush2.msra.mxu0 0.0
    %952 = vmatprep.subr.mxu0 0.0
    %953 = vmatpush2.msra.mxu0 0.0
    %954 = vmatprep.subr.mxu0 0.0
    %955 = vmatpush2.msra.mxu0 0.0
    %956 = vmatprep.subr.mxu0 0.0
    %957 = vmatpush2.msra.mxu0 0.0
    %958 = vmatprep.subr.mxu0 0.0
    %959 = vmatpush2.msra.mxu0 0.0
    %960 = vmatprep.subr.mxu0 0.0
    %961 = vmatpush2.msra.mxu0 0.0
    %962 = vmatprep.subr.mxu0 0.0
    %963 = vmatpush2.msra.mxu0 0.0
    %964 = vmatprep.subr.mxu0 0.0
    %965 = vmatpush2.msra.mxu0 0.0
    %966 = vmatprep.subr.mxu0 0.0
    %967 = vmatpush2.msra.mxu0 0.0
    %968 = vmatprep.subr.mxu0 0.0
    %969 = vmatpush2.msra.mxu0 0.0
    %970 = vmatprep.subr.mxu0 0.0
    %971 = vmatpush2.msra.mxu0 0.0
    %972 = vmatprep.subr.mxu0 0.0
    %973 = vmatpush2.msra.mxu0 0.0
    %974 = vmatprep.subr.mxu0 0.0
    %975 = vmatpush2.msra.mxu0 0.0
    %976 = vmatprep.subr.mxu0 0.0
    %977 = vmatpush2.msra.mxu0 0.0
    %978 = vmatprep.mubr.f32.mxu0 0.0
    %979 = vmatmul.mubr.f32.gmra.mxu0 %v736
    %v980 = vpop.f32.mrf.mxu0
    %v981 = vadd.f32 0.0, %v980
    %v982 = vpop.f32.mrf.mxu0
    %983 = vmatprep.mubr.f32.mxu0 0.0
    %984 = vmatmul.mubr.f32.gmra.mxu0 %v737
    %v985 = vpop.f32.mrf.mxu0
    %v986 = vadd.f32 0.0, %v985
    %v987 = vpop.f32.mrf.mxu0
    %988 = vmatprep.mubr.f32.mxu0 0.0
    %989 = vmatmul.mubr.f32.gmra.mxu0 %v738
    %v990 = vpop.f32.mrf.mxu0
    %v991 = vadd.f32 0.0, %v990
    %v992 = vpop.f32.mrf.mxu0
    %993 = vmatprep.mubr.f32.mxu0 0.0
    %994 = vmatmul.mubr.f32.gmra.mxu0 %v739
    %v995 = vpop.f32.mrf.mxu0
    %v996 = vadd.f32 0.0, %v995
    %v997 = vpop.f32.mrf.mxu0
    %998 = vdwg.mxu0
    %999 = vmatprep.subr.mxu0 0.0
    %1000 = vmatpush1.msra.mxu0 %v258
    %1001 = vmatprep.subr.mxu0 0.0
    %1002 = vmatpush1.msra.mxu0 %v253
    %1003 = vmatprep.subr.mxu0 0.0
    %1004 = vmatpush1.msra.mxu0 %v248
    %1005 = vmatprep.subr.mxu0 0.0
    %1006 = vmatpush1.msra.mxu0 %v243
    %1007 = vmatprep.subr.mxu0 0.0
    %1008 = vmatpush1.msra.mxu0 %v238
    %1009 = vmatprep.subr.mxu0 0.0
    %1010 = vmatpush1.msra.mxu0 %v233
    %1011 = vmatprep.subr.mxu0 0.0
    %1012 = vmatpush1.msra.mxu0 %v228
    %1013 = vmatprep.subr.mxu0 0.0
    %1014 = vmatpush1.msra.mxu0 %v223
    %1015 = vmatprep.subr.mxu0 0.0
    %1016 = vmatpush1.msra.mxu0 %v218
    %1017 = vmatprep.subr.mxu0 0.0
    %1018 = vmatpush1.msra.mxu0 %v213
    %1019 = vmatprep.subr.mxu0 0.0
    %1020 = vmatpush1.msra.mxu0 %v208
    %1021 = vmatprep.subr.mxu0 0.0
    %1022 = vmatpush1.msra.mxu0 %v203
    %1023 = vmatprep.subr.mxu0 0.0
    %1024 = vmatpush1.msra.mxu0 %v198
    %1025 = vmatprep.subr.mxu0 0.0
    %1026 = vmatpush1.msra.mxu0 %v193
    %1027 = vmatprep.subr.mxu0 0.0
    %1028 = vmatpush1.msra.mxu0 %v188
    %1029 = vmatprep.subr.mxu0 0.0
    %1030 = vmatpush1.msra.mxu0 %v183
    %1031 = vmatprep.subr.mxu0 0.0
    %1032 = vmatpush2.msra.mxu0 0.0
    %1033 = vmatprep.subr.mxu0 0.0
    %1034 = vmatpush2.msra.mxu0 0.0
    %1035 = vmatprep.subr.mxu0 0.0
    %1036 = vmatpush2.msra.mxu0 0.0
    %1037 = vmatprep.subr.mxu0 0.0
    %1038 = vmatpush2.msra.mxu0 0.0
    %1039 = vmatprep.subr.mxu0 0.0
    %1040 = vmatpush2.msra.mxu0 0.0
    %1041 = vmatprep.subr.mxu0 0.0
    %1042 = vmatpush2.msra.mxu0 0.0
    %1043 = vmatprep.subr.mxu0 0.0
    %1044 = vmatpush2.msra.mxu0 0.0
    %1045 = vmatprep.subr.mxu0 0.0
    %1046 = vmatpush2.msra.mxu0 0.0
    %1047 = vmatprep.subr.mxu0 0.0
    %1048 = vmatpush2.msra.mxu0 0.0
    %1049 = vmatprep.subr.mxu0 0.0
    %1050 = vmatpush2.msra.mxu0 0.0
    %1051 = vmatprep.subr.mxu0 0.0
    %1052 = vmatpush2.msra.mxu0 0.0
    %1053 = vmatprep.subr.mxu0 0.0
    %1054 = vmatpush2.msra.mxu0 0.0
    %1055 = vmatprep.subr.mxu0 0.0
    %1056 = vmatpush2.msra.mxu0 0.0
    %1057 = vmatprep.subr.mxu0 0.0
    %1058 = vmatpush2.msra.mxu0 0.0
    %1059 = vmatprep.subr.mxu0 0.0
    %1060 = vmatpush2.msra.mxu0 0.0
    %1061 = vmatprep.subr.mxu0 0.0
    %1062 = vmatpush2.msra.mxu0 0.0
    %1063 = vmatprep.mubr.f32.mxu0 0.0
    %1064 = vmatmul.mubr.f32.gmra.mxu0 %v740
    %v1065 = vpop.f32.mrf.mxu0
    %v1066 = vadd.f32 0.0, %v1065
    %v1067 = vpop.f32.mrf.mxu0
    %1068 = vmatprep.mubr.f32.mxu0 0.0
    %1069 = vmatmul.mubr.f32.gmra.mxu0 %v741
    %v1070 = vpop.f32.mrf.mxu0
    %v1071 = vadd.f32 0.0, %v1070
    %v1072 = vpop.f32.mrf.mxu0
    %1073 = vmatprep.mubr.f32.mxu0 0.0
    %1074 = vmatmul.mubr.f32.gmra.mxu0 %v742
    %v1075 = vpop.f32.mrf.mxu0
    %v1076 = vadd.f32 0.0, %v1075
    %v1077 = vpop.f32.mrf.mxu0
    %1078 = vmatprep.mubr.f32.mxu0 0.0
    %1079 = vmatmul.mubr.f32.gmra.mxu0 %v743
    %v1080 = vpop.f32.mrf.mxu0
    %v1081 = vadd.f32 0.0, %v1080
    %v1082 = vpop.f32.mrf.mxu0
    %1083 = vdwg.mxu0
    %1088 = vrot.lane.b32.xlu0 %v896, 4
    %v1089 = vpop.permute.xlu0 %1088
    %1090 = vrot.lane.b32.xlu0 %v901, 4
    %v1091 = vpop.permute.xlu0 %1090
    %1092 = vrot.lane.b32.xlu0 %v906, 4
    %v1093 = vpop.permute.xlu0 %1092
    %1094 = vrot.lane.b32.xlu0 %v911, 4
    %v1095 = vpop.permute.xlu0 %1094
    %1104 = vrot.lane.b32.xlu0 %v981, 8
    %v1105 = vpop.permute.xlu0 %1104
    %1106 = vrot.lane.b32.xlu0 %v986, 8
    %v1107 = vpop.permute.xlu0 %1106
    %1108 = vrot.lane.b32.xlu0 %v991, 8
    %v1109 = vpop.permute.xlu0 %1108
    %1110 = vrot.lane.b32.xlu0 %v996, 8
    %v1111 = vpop.permute.xlu0 %1110
    %1120 = vrot.lane.b32.xlu0 %v1066, 12
    %v1121 = vpop.permute.xlu0 %1120
    %1122 = vrot.lane.b32.xlu0 %v1071, 12
    %v1123 = vpop.permute.xlu0 %1122
    %1124 = vrot.lane.b32.xlu0 %v1076, 12
    %v1125 = vpop.permute.xlu0 %1124
    %1126 = vrot.lane.b32.xlu0 %v1081, 12
    %v1127 = vpop.permute.xlu0 %1126
    %vm1132 = vcmask 31744
    %v1133 = vsel %vm1132, %v811, %v1089
    %v1134 = vsel %vm1132, %v816, %v1091
    %v1135 = vsel %vm1132, %v821, %v1093
    %v1136 = vsel %vm1132, %v826, %v1095
    %v1137 = vsel %vm351, %v1133, %v1105
    %v1138 = vsel %vm351, %v1134, %v1107
    %v1139 = vsel %vm351, %v1135, %v1109
    %v1140 = vsel %vm351, %v1136, %v1111
    %v1141 = vsel %vm711, %v1137, %v1121
    %v1142 = vsel %vm711, %v1138, %v1123
    %v1143 = vsel %vm711, %v1139, %v1125
    %v1144 = vsel %vm711, %v1140, %v1127
    %v1145 = vld [vmem:[%s4] sm:$0xff]
    %v1146 = vld [vmem:[%s4 + $0x8] sm:$0xff]
    %v1148 = vsel %vm67, %v1141, 0
    %v1151 = vsel %vm67, %v1142, 0
    %v1154 = vsel %vm67, %v1143, 0
    %v1157 = vsel %vm67, %v1144, 0
    %1159 = vmatprep.subr.mxu0 0.0
    %1160 = vmatpush1.msra.mxu0 0.0
    %1161 = vmatprep.subr.mxu0 0.0
    %1162 = vmatpush1.msra.mxu0 0.0
    %1163 = vmatprep.subr.mxu0 0.0
    %1164 = vmatpush1.msra.mxu0 0.0
    %1165 = vmatprep.subr.mxu0 0.0
    %1166 = vmatpush1.msra.mxu0 0.0
    %1167 = vmatprep.subr.mxu0 0.0
    %1168 = vmatpush1.msra.mxu0 0.0
    %1169 = vmatprep.subr.mxu0 0.0
    %1170 = vmatpush1.msra.mxu0 0.0
    %1171 = vmatprep.subr.mxu0 0.0
    %1172 = vmatpush1.msra.mxu0 0.0
    %1173 = vmatprep.subr.mxu0 0.0
    %1174 = vmatpush1.msra.mxu0 0.0
    %1175 = vmatprep.subr.mxu0 0.0
    %1176 = vmatpush1.msra.mxu0 0.0
    %1177 = vmatprep.subr.mxu0 0.0
    %1178 = vmatpush1.msra.mxu0 0.0
    %1179 = vmatprep.subr.mxu0 0.0
    %1180 = vmatpush1.msra.mxu0 0.0
    %1181 = vmatprep.subr.mxu0 0.0
    %1182 = vmatpush1.msra.mxu0 0.0
    %1183 = vmatprep.subr.mxu0 0.0
    %1184 = vmatpush1.msra.mxu0 0.0
    %1185 = vmatprep.subr.mxu0 0.0
    %1186 = vmatpush1.msra.mxu0 0.0
    %1187 = vmatprep.subr.mxu0 0.0
    %1188 = vmatpush1.msra.mxu0 %v1146
    %1189 = vmatprep.subr.mxu0 0.0
    %1190 = vmatpush1.msra.mxu0 %v1145
    %1191 = vmatprep.subr.mxu0 0.0
    %1192 = vmatpush2.msra.mxu0 0.0
    %1193 = vmatprep.subr.mxu0 0.0
    %1194 = vmatpush2.msra.mxu0 0.0
    %1195 = vmatprep.subr.mxu0 0.0
    %1196 = vmatpush2.msra.mxu0 0.0
    %1197 = vmatprep.subr.mxu0 0.0
    %1198 = vmatpush2.msra.mxu0 0.0
    %1199 = vmatprep.subr.mxu0 0.0
    %1200 = vmatpush2.msra.mxu0 0.0
    %1201 = vmatprep.subr.mxu0 0.0
    %1202 = vmatpush2.msra.mxu0 0.0
    %1203 = vmatprep.subr.mxu0 0.0
    %1204 = vmatpush2.msra.mxu0 0.0
    %1205 = vmatprep.subr.mxu0 0.0
    %1206 = vmatpush2.msra.mxu0 0.0
    %1207 = vmatprep.subr.mxu0 0.0
    %1208 = vmatpush2.msra.mxu0 0.0
    %1209 = vmatprep.subr.mxu0 0.0
    %1210 = vmatpush2.msra.mxu0 0.0
    %1211 = vmatprep.subr.mxu0 0.0
    %1212 = vmatpush2.msra.mxu0 0.0
    %1213 = vmatprep.subr.mxu0 0.0
    %1214 = vmatpush2.msra.mxu0 0.0
    %1215 = vmatprep.subr.mxu0 0.0
    %1216 = vmatpush2.msra.mxu0 0.0
    %1217 = vmatprep.subr.mxu0 0.0
    %1218 = vmatpush2.msra.mxu0 0.0
    %1219 = vmatprep.subr.mxu0 0.0
    %1220 = vmatpush2.msra.mxu0 0.0
    %1221 = vmatprep.subr.mxu0 0.0
    %1222 = vmatpush2.msra.mxu0 0.0
    %1223 = vmatprep.mubr.f32.mxu0 0.0
    %1224 = vmatmul.mubr.f32.gmra.mxu0 %v1148
    %v1225 = vpop.f32.mrf.mxu0
    %v1226 = vadd.f32 0.0, %v1225
    %v1227 = vpop.f32.mrf.mxu0
    %1228 = vmatprep.mubr.f32.mxu0 0.0
    %1229 = vmatmul.mubr.f32.gmra.mxu0 %v1151
    %v1230 = vpop.f32.mrf.mxu0
    %v1231 = vadd.f32 0.0, %v1230
    %v1232 = vpop.f32.mrf.mxu0
    %1233 = vmatprep.mubr.f32.mxu0 0.0
    %1234 = vmatmul.mubr.f32.gmra.mxu0 %v1154
    %v1235 = vpop.f32.mrf.mxu0
    %v1236 = vadd.f32 0.0, %v1235
    %v1237 = vpop.f32.mrf.mxu0
    %1238 = vmatprep.mubr.f32.mxu0 0.0
    %1239 = vmatmul.mubr.f32.gmra.mxu0 %v1157
    %v1240 = vpop.f32.mrf.mxu0
    %v1241 = vadd.f32 0.0, %v1240
    %v1242 = vpop.f32.mrf.mxu0
    %1243 = vdwg.mxu0
    %v1244 = vld [vmem:[%s6] sm:$0x1]
    %v1246 = vlaneseq
    %v1247 = vshrl.u32 %v1246, 7
    %v1248 = vsub.s32 0, %v1247
    %v1249 = vrot.slane %v1244, %v1248
    %1250 = vrot.lane.b32.xlu0 %v1249, 16
    %v1251 = vpop.permute.xlu0 %1250
    %v1253 = vadd.f32 %v1226, %v1251
    %v1254 = vadd.f32 %v1231, %v1251
    %v1255 = vadd.f32 %v1236, %v1251
    %v1256 = vadd.f32 %v1241, %v1251
    %v1257 = vmax.f32 %v1253, 0.0
    %v1258 = vmax.f32 %v1254, 0.0
    %v1259 = vmax.f32 %v1255, 0.0
    %v1260 = vmax.f32 %v1256, 0.0
    %v1261 = vld [vmem:[%s5] sm:$0xff]
    %1266 = vrot.lane.b32.xlu0 %v1257, 112
    %v1267 = vpop.permute.xlu0 %1266
    %1268 = vrot.lane.b32.xlu0 %v1258, 112
    %v1269 = vpop.permute.xlu0 %1268
    %1270 = vrot.lane.b32.xlu0 %v1259, 112
    %v1271 = vpop.permute.xlu0 %1270
    %1272 = vrot.lane.b32.xlu0 %v1260, 112
    %v1273 = vpop.permute.xlu0 %1272
    %v1274 = vsel %vm351, %v1267, 0
    %v1276 = vsel %vm351, %v1269, 0
    %v1278 = vsel %vm351, %v1271, 0
    %v1280 = vsel %vm351, %v1273, 0
    %1282 = vmatprep.subr.mxu0 0.0
    %1283 = vmatpush1.msra.mxu0 0.0
    %1284 = vmatprep.subr.mxu0 0.0
    %1285 = vmatpush1.msra.mxu0 0.0
    %1286 = vmatprep.subr.mxu0 0.0
    %1287 = vmatpush1.msra.mxu0 0.0
    %1288 = vmatprep.subr.mxu0 0.0
    %1289 = vmatpush1.msra.mxu0 0.0
    %1290 = vmatprep.subr.mxu0 0.0
    %1291 = vmatpush1.msra.mxu0 0.0
    %1292 = vmatprep.subr.mxu0 0.0
    %1293 = vmatpush1.msra.mxu0 0.0
    %1294 = vmatprep.subr.mxu0 0.0
    %1295 = vmatpush1.msra.mxu0 0.0
    %1296 = vmatprep.subr.mxu0 0.0
    %1297 = vmatpush1.msra.mxu0 0.0
    %1298 = vmatprep.subr.mxu0 0.0
    %1299 = vmatpush1.msra.mxu0 0.0
    %1300 = vmatprep.subr.mxu0 0.0
    %1301 = vmatpush1.msra.mxu0 0.0
    %1302 = vmatprep.subr.mxu0 0.0
    %1303 = vmatpush1.msra.mxu0 0.0
    %1304 = vmatprep.subr.mxu0 0.0
    %1305 = vmatpush1.msra.mxu0 0.0
    %1306 = vmatprep.subr.mxu0 0.0
    %1307 = vmatpush1.msra.mxu0 0.0
    %1308 = vmatprep.subr.mxu0 0.0
    %1309 = vmatpush1.msra.mxu0 0.0
    %1310 = vmatprep.subr.mxu0 0.0
    %1311 = vmatpush1.msra.mxu0 0.0
    %1312 = vmatprep.subr.mxu0 0.0
    %1313 = vmatpush1.msra.mxu0 %v1261
    %1314 = vmatprep.subr.mxu0 0.0
    %1315 = vmatpush2.msra.mxu0 0.0
    %1316 = vmatprep.subr.mxu0 0.0
    %1317 = vmatpush2.msra.mxu0 0.0
    %1318 = vmatprep.subr.mxu0 0.0
    %1319 = vmatpush2.msra.mxu0 0.0
    %1320 = vmatprep.subr.mxu0 0.0
    %1321 = vmatpush2.msra.mxu0 0.0
    %1322 = vmatprep.subr.mxu0 0.0
    %1323 = vmatpush2.msra.mxu0 0.0
    %1324 = vmatprep.subr.mxu0 0.0
    %1325 = vmatpush2.msra.mxu0 0.0
    %1326 = vmatprep.subr.mxu0 0.0
    %1327 = vmatpush2.msra.mxu0 0.0
    %1328 = vmatprep.subr.mxu0 0.0
    %1329 = vmatpush2.msra.mxu0 0.0
    %1330 = vmatprep.subr.mxu0 0.0
    %1331 = vmatpush2.msra.mxu0 0.0
    %1332 = vmatprep.subr.mxu0 0.0
    %1333 = vmatpush2.msra.mxu0 0.0
    %1334 = vmatprep.subr.mxu0 0.0
    %1335 = vmatpush2.msra.mxu0 0.0
    %1336 = vmatprep.subr.mxu0 0.0
    %1337 = vmatpush2.msra.mxu0 0.0
    %1338 = vmatprep.subr.mxu0 0.0
    %1339 = vmatpush2.msra.mxu0 0.0
    %1340 = vmatprep.subr.mxu0 0.0
    %1341 = vmatpush2.msra.mxu0 0.0
    %1342 = vmatprep.subr.mxu0 0.0
    %1343 = vmatpush2.msra.mxu0 0.0
    %1344 = vmatprep.subr.mxu0 0.0
    %1345 = vmatpush2.msra.mxu0 0.0
    %1346 = vmatprep.mubr.f32.mxu0 0.0
    %1347 = vmatmul.mubr.f32.gmra.mxu0 %v1274
    %v1348 = vpop.f32.mrf.mxu0
    %v1349 = vadd.f32 0.0, %v1348
    %v1350 = vpop.f32.mrf.mxu0
    %1351 = vmatprep.mubr.f32.mxu0 0.0
    %1352 = vmatmul.mubr.f32.gmra.mxu0 %v1276
    %v1353 = vpop.f32.mrf.mxu0
    %v1354 = vadd.f32 0.0, %v1353
    %v1355 = vpop.f32.mrf.mxu0
    %1356 = vmatprep.mubr.f32.mxu0 0.0
    %1357 = vmatmul.mubr.f32.gmra.mxu0 %v1278
    %v1358 = vpop.f32.mrf.mxu0
    %v1359 = vadd.f32 0.0, %v1358
    %v1360 = vpop.f32.mrf.mxu0
    %1361 = vmatprep.mubr.f32.mxu0 0.0
    %1362 = vmatmul.mubr.f32.gmra.mxu0 %v1280
    %v1363 = vpop.f32.mrf.mxu0
    %v1364 = vadd.f32 0.0, %v1363
    %v1365 = vpop.f32.mrf.mxu0
    %1366 = vdwg.mxu0
    %1371 = vrot.lane.b32.xlu0 %v1349, 4
    %v1372 = vpop.permute.xlu0 %1371
    %1373 = vrot.lane.b32.xlu0 %v1354, 4
    %v1374 = vpop.permute.xlu0 %1373
    %1375 = vrot.lane.b32.xlu0 %v1359, 4
    %v1376 = vpop.permute.xlu0 %1375
    %1377 = vrot.lane.b32.xlu0 %v1364, 4
    %v1378 = vpop.permute.xlu0 %1377
    %v1383 = vadd.f32 %v1226, %v1372
    %v1384 = vadd.f32 %v1231, %v1374
    %v1385 = vadd.f32 %v1236, %v1376
    %v1386 = vadd.f32 %v1241, %v1378
    %1387 = vrot.lane.b32.xlu0 %v1249, 124
    %v1388 = vpop.permute.xlu0 %1387
    %v1390 = vmul.f32 %v1383, %v1388
    %v1391 = vmul.f32 %v1384, %v1388
    %v1392 = vmul.f32 %v1385, %v1388
    %v1393 = vmul.f32 %v1386, %v1388
    %1394 = vrot.lane.b32.xlu0 %v1249, 112
    %v1395 = vpop.permute.xlu0 %1394
    %v1397 = vadd.f32 %v1390, %v1395
    %v1398 = vadd.f32 %v1391, %v1395
    %v1399 = vadd.f32 %v1392, %v1395
    %v1400 = vadd.f32 %v1393, %v1395
    %1405 = vrot.lane.b32.xlu0 %v1397, 124
    %v1406 = vpop.permute.xlu0 %1405
    %1407 = vrot.lane.b32.xlu0 %v1398, 124
    %v1408 = vpop.permute.xlu0 %1407
    %1409 = vrot.lane.b32.xlu0 %v1399, 124
    %v1410 = vpop.permute.xlu0 %1409
    %1411 = vrot.lane.b32.xlu0 %v1400, 124
    %v1412 = vpop.permute.xlu0 %1411
    %1417 = vst.msk [vmem:[#allocation2] sm:$0xff] %vm711, %v1406
    %1418 = vst.msk [vmem:[#allocation2 + $0x8] sm:$0xff] %vm711, %v1408
    %1419 = vst.msk [vmem:[#allocation2 + $0x10] sm:$0xff] %vm711, %v1410
    %1420 = vst.msk [vmem:[#allocation2 + $0x18] sm:$0xff] %vm711, %v1412
    %v1421 = vld [vmem:[%s8] sm:$0x1]
    %v1423 = vlaneseq
    %v1424 = vshrl.u32 %v1423, 7
    %v1425 = vsub.s32 0, %v1424
    %v1426 = vrot.slane %v1421, %v1425
    %v1428 = vmul.f32 %v1226, %v1426
    %v1429 = vmul.f32 %v1231, %v1426
    %v1430 = vmul.f32 %v1236, %v1426
    %v1431 = vmul.f32 %v1241, %v1426
    %1432 = vrot.lane.b32.xlu0 %v1426, 124
    %v1433 = vpop.permute.xlu0 %1432
    %v1435 = vadd.f32 %v1428, %v1433
    %v1436 = vadd.f32 %v1429, %v1433
    %v1437 = vadd.f32 %v1430, %v1433
    %v1438 = vadd.f32 %v1431, %v1433
    %1439 = vst.msk [vmem:[%s15] sm:$0xff] %vm1132, %v1435
    %1440 = vst.msk [vmem:[%s15 + $0x8] sm:$0xff] %vm1132, %v1436
    %1441 = vst.msk [vmem:[%s15 + $0x10] sm:$0xff] %vm1132, %v1437
    %1442 = vst.msk [vmem:[%s15 + $0x18] sm:$0xff] %vm1132, %v1438
    %v1443 = vmul.f32 %v631, %v631
    %v1444 = vmul.f32 %v632, %v632
    %v1445 = vmul.f32 %v633, %v633
    %v1446 = vmul.f32 %v634, %v634
    %v1447 = vmul.f32 %v635, %v635
    %v1448 = vmul.f32 %v636, %v636
    %v1449 = vmul.f32 %v637, %v637
    %v1450 = vmul.f32 %v638, %v638
    %v1451 = vmul.f32 %v639, %v639
    %v1452 = vmul.f32 %v640, %v640
    %v1453 = vmul.f32 %v641, %v641
    %v1454 = vmul.f32 %v642, %v642
    %v1455 = vmul.f32 %v643, %v643
    %v1456 = vmul.f32 %v644, %v644
    %v1457 = vmul.f32 %v645, %v645
    %v1458 = vmul.f32 %v646, %v646
    %1475 = vrot.lane.b32.xlu0 %v1443, 124
    %v1476 = vpop.permute.xlu0 %1475
    %1477 = vrot.lane.b32.xlu0 %v1444, 124
    %v1478 = vpop.permute.xlu0 %1477
    %1479 = vrot.lane.b32.xlu0 %v1445, 124
    %v1480 = vpop.permute.xlu0 %1479
    %1481 = vrot.lane.b32.xlu0 %v1446, 124
    %v1482 = vpop.permute.xlu0 %1481
    %1483 = vrot.lane.b32.xlu0 %v1447, 124
    %v1484 = vpop.permute.xlu0 %1483
    %1485 = vrot.lane.b32.xlu0 %v1448, 124
    %v1486 = vpop.permute.xlu0 %1485
    %1487 = vrot.lane.b32.xlu0 %v1449, 124
    %v1488 = vpop.permute.xlu0 %1487
    %1489 = vrot.lane.b32.xlu0 %v1450, 124
    %v1490 = vpop.permute.xlu0 %1489
    %1491 = vrot.lane.b32.xlu0 %v1451, 124
    %v1492 = vpop.permute.xlu0 %1491
    %1493 = vrot.lane.b32.xlu0 %v1452, 124
    %v1494 = vpop.permute.xlu0 %1493
    %1495 = vrot.lane.b32.xlu0 %v1453, 124
    %v1496 = vpop.permute.xlu0 %1495
    %1497 = vrot.lane.b32.xlu0 %v1454, 124
    %v1498 = vpop.permute.xlu0 %1497
    %1499 = vrot.lane.b32.xlu0 %v1455, 124
    %v1500 = vpop.permute.xlu0 %1499
    %1501 = vrot.lane.b32.xlu0 %v1456, 124
    %v1502 = vpop.permute.xlu0 %1501
    %1503 = vrot.lane.b32.xlu0 %v1457, 124
    %v1504 = vpop.permute.xlu0 %1503
    %1505 = vrot.lane.b32.xlu0 %v1458, 124
    %v1506 = vpop.permute.xlu0 %1505
    %v1523 = vsel %vm711, %v1476, 0.0
    %1524 = vadd.xlane.f32.xlu0 %v1523
    %v1525 = vpop.xlane.xlu0 %1524
    %v1526 = vsel %vm711, %v1478, 0.0
    %1527 = vadd.xlane.f32.xlu0 %v1526
    %v1528 = vpop.xlane.xlu0 %1527
    %v1529 = vsel %vm711, %v1480, 0.0
    %1530 = vadd.xlane.f32.xlu0 %v1529
    %v1531 = vpop.xlane.xlu0 %1530
    %v1532 = vsel %vm711, %v1482, 0.0
    %1533 = vadd.xlane.f32.xlu0 %v1532
    %v1534 = vpop.xlane.xlu0 %1533
    %v1535 = vsel %vm711, %v1484, 0.0
    %1536 = vadd.xlane.f32.xlu0 %v1535
    %v1537 = vpop.xlane.xlu0 %1536
    %v1538 = vsel %vm711, %v1486, 0.0
    %1539 = vadd.xlane.f32.xlu0 %v1538
    %v1540 = vpop.xlane.xlu0 %1539
    %v1541 = vsel %vm711, %v1488, 0.0
    %1542 = vadd.xlane.f32.xlu0 %v1541
    %v1543 = vpop.xlane.xlu0 %1542
    %v1544 = vsel %vm711, %v1490, 0.0
    %1545 = vadd.xlane.f32.xlu0 %v1544
    %v1546 = vpop.xlane.xlu0 %1545
    %v1547 = vsel %vm711, %v1492, 0.0
    %1548 = vadd.xlane.f32.xlu0 %v1547
    %v1549 = vpop.xlane.xlu0 %1548
    %v1550 = vsel %vm711, %v1494, 0.0
    %1551 = vadd.xlane.f32.xlu0 %v1550
    %v1552 = vpop.xlane.xlu0 %1551
    %v1553 = vsel %vm711, %v1496, 0.0
    %1554 = vadd.xlane.f32.xlu0 %v1553
    %v1555 = vpop.xlane.xlu0 %1554
    %v1556 = vsel %vm711, %v1498, 0.0
    %1557 = vadd.xlane.f32.xlu0 %v1556
    %v1558 = vpop.xlane.xlu0 %1557
    %v1559 = vsel %vm711, %v1500, 0.0
    %1560 = vadd.xlane.f32.xlu0 %v1559
    %v1561 = vpop.xlane.xlu0 %1560
    %v1562 = vsel %vm711, %v1502, 0.0
    %1563 = vadd.xlane.f32.xlu0 %v1562
    %v1564 = vpop.xlane.xlu0 %1563
    %v1565 = vsel %vm711, %v1504, 0.0
    %1566 = vadd.xlane.f32.xlu0 %v1565
    %v1567 = vpop.xlane.xlu0 %1566
    %v1568 = vsel %vm711, %v1506, 0.0
    %1569 = vadd.xlane.f32.xlu0 %v1568
    %v1570 = vpop.xlane.xlu0 %1569
    %v1571 = vmul.f32 %v1397, %v1397
    %v1572 = vmul.f32 %v1398, %v1398
    %v1573 = vmul.f32 %v1399, %v1399
    %v1574 = vmul.f32 %v1400, %v1400
    %1579 = vrot.lane.b32.xlu0 %v1571, 124
    %v1580 = vpop.permute.xlu0 %1579
    %1581 = vrot.lane.b32.xlu0 %v1572, 124
    %v1582 = vpop.permute.xlu0 %1581
    %1583 = vrot.lane.b32.xlu0 %v1573, 124
    %v1584 = vpop.permute.xlu0 %1583
    %1585 = vrot.lane.b32.xlu0 %v1574, 124
    %v1586 = vpop.permute.xlu0 %1585
    %v1591 = vsel %vm711, %v1580, 0.0
    %1592 = vadd.xlane.f32.xlu0 %v1591
    %v1593 = vpop.xlane.xlu0 %1592
    %v1594 = vsel %vm711, %v1582, 0.0
    %1595 = vadd.xlane.f32.xlu0 %v1594
    %v1596 = vpop.xlane.xlu0 %1595
    %v1597 = vsel %vm711, %v1584, 0.0
    %1598 = vadd.xlane.f32.xlu0 %v1597
    %v1599 = vpop.xlane.xlu0 %1598
    %v1600 = vsel %vm711, %v1586, 0.0
    %1601 = vadd.xlane.f32.xlu0 %v1600
    %v1602 = vpop.xlane.xlu0 %1601
    %v1603 = vmul.f32 %v1435, %v1435
    %v1604 = vmul.f32 %v1436, %v1436
    %v1605 = vmul.f32 %v1437, %v1437
    %v1606 = vmul.f32 %v1438, %v1438
    %v1607 = vsel %vm1132, %v1603, 0.0
    %1608 = vadd.xlane.f32.xlu0 %v1607
    %v1609 = vpop.xlane.xlu0 %1608
    %v1610 = vsel %vm1132, %v1604, 0.0
    %1611 = vadd.xlane.f32.xlu0 %v1610
    %v1612 = vpop.xlane.xlu0 %1611
    %v1613 = vsel %vm1132, %v1605, 0.0
    %1614 = vadd.xlane.f32.xlu0 %v1613
    %v1615 = vpop.xlane.xlu0 %1614
    %v1616 = vsel %vm1132, %v1606, 0.0
    %1617 = vadd.xlane.f32.xlu0 %v1616
    %v1618 = vpop.xlane.xlu0 %1617
    %v1619 = vld [vmem:[%s9] sm:$0x3]
    %1620 = vmatprep.subr.mxu0 0.0
    %1621 = vmatpush1.msra.mxu0 %v1570
    %1622 = vmatprep.subr.mxu0 0.0
    %1623 = vmatpush1.msra.mxu0 %v1567
    %1624 = vmatprep.subr.mxu0 0.0
    %1625 = vmatpush1.msra.mxu0 %v1564
    %1626 = vmatprep.subr.mxu0 0.0
    %1627 = vmatpush1.msra.mxu0 %v1561
    %1628 = vmatprep.subr.mxu0 0.0
    %1629 = vmatpush1.msra.mxu0 %v1558
    %1630 = vmatprep.subr.mxu0 0.0
    %1631 = vmatpush1.msra.mxu0 %v1555
    %1632 = vmatprep.subr.mxu0 0.0
    %1633 = vmatpush1.msra.mxu0 %v1552
    %1634 = vmatprep.subr.mxu0 0.0
    %1635 = vmatpush1.msra.mxu0 %v1549
    %1636 = vmatprep.subr.mxu0 0.0
    %1637 = vmatpush1.msra.mxu0 %v1546
    %1638 = vmatprep.subr.mxu0 0.0
    %1639 = vmatpush1.msra.mxu0 %v1543
    %1640 = vmatprep.subr.mxu0 0.0
    %1641 = vmatpush1.msra.mxu0 %v1540
    %1642 = vmatprep.subr.mxu0 0.0
    %1643 = vmatpush1.msra.mxu0 %v1537
    %1644 = vmatprep.subr.mxu0 0.0
    %1645 = vmatpush1.msra.mxu0 %v1534
    %1646 = vmatprep.subr.mxu0 0.0
    %1647 = vmatpush1.msra.mxu0 %v1531
    %1648 = vmatprep.subr.mxu0 0.0
    %1649 = vmatpush1.msra.mxu0 %v1528
    %1650 = vmatprep.subr.mxu0 0.0
    %1651 = vmatpush1.msra.mxu0 %v1525
    %1652 = vmatprep.subr.mxu0 0.0
    %1653 = vmatpush2.msra.mxu0 0.0
    %1654 = vmatprep.subr.mxu0 0.0
    %1655 = vmatpush2.msra.mxu0 0.0
    %1656 = vmatprep.subr.mxu0 0.0
    %1657 = vmatpush2.msra.mxu0 0.0
    %1658 = vmatprep.subr.mxu0 0.0
    %1659 = vmatpush2.msra.mxu0 0.0
    %1660 = vmatprep.subr.mxu0 0.0
    %1661 = vmatpush2.msra.mxu0 0.0
    %1662 = vmatprep.subr.mxu0 0.0
    %1663 = vmatpush2.msra.mxu0 0.0
    %1664 = vmatprep.subr.mxu0 0.0
    %1665 = vmatpush2.msra.mxu0 0.0
    %1666 = vmatprep.subr.mxu0 0.0
    %1667 = vmatpush2.msra.mxu0 0.0
    %1668 = vmatprep.subr.mxu0 0.0
    %1669 = vmatpush2.msra.mxu0 0.0
    %1670 = vmatprep.subr.mxu0 0.0
    %1671 = vmatpush2.msra.mxu0 0.0
    %1672 = vmatprep.subr.mxu0 0.0
    %1673 = vmatpush2.msra.mxu0 0.0
    %1674 = vmatprep.subr.mxu0 0.0
    %1675 = vmatpush2.msra.mxu0 0.0
    %1676 = vmatprep.subr.mxu0 0.0
    %1677 = vmatpush2.msra.mxu0 0.0
    %1678 = vmatprep.subr.mxu0 0.0
    %1679 = vmatpush2.msra.mxu0 0.0
    %1680 = vmatprep.subr.mxu0 0.0
    %1681 = vmatpush2.msra.mxu0 0.0
    %1682 = vmatprep.subr.mxu0 0.0
    %1683 = vmatpush2.msra.mxu0 0.0
    %1684 = vmatprep.mubr.f32.mxu0 0.0
    %1685 = vmatmul.mubr.f32.gmra.mxu0 %v1619
    %v1686 = vpop.f32.mrf.mxu0
    %v1687 = vadd.f32 0.0, %v1686
    %v1688 = vpop.f32.mrf.mxu0
    %1689 = vdwg.mxu0
    %v1690 = vld [vmem:[%s10] sm:$0x3]
    %vm1691 = vcmask 261120
    %v1693 = vsel %vm1691, %v1690, 0
    %1695 = vmatprep.subr.mxu0 0.0
    %1696 = vmatpush1.msra.mxu0 0.0
    %1697 = vmatprep.subr.mxu0 0.0
    %1698 = vmatpush1.msra.mxu0 0.0
    %1699 = vmatprep.subr.mxu0 0.0
    %1700 = vmatpush1.msra.mxu0 0.0
    %1701 = vmatprep.subr.mxu0 0.0
    %1702 = vmatpush1.msra.mxu0 0.0
    %1703 = vmatprep.subr.mxu0 0.0
    %1704 = vmatpush1.msra.mxu0 0.0
    %1705 = vmatprep.subr.mxu0 0.0
    %1706 = vmatpush1.msra.mxu0 0.0
    %1707 = vmatprep.subr.mxu0 0.0
    %1708 = vmatpush1.msra.mxu0 0.0
    %1709 = vmatprep.subr.mxu0 0.0
    %1710 = vmatpush1.msra.mxu0 0.0
    %1711 = vmatprep.subr.mxu0 0.0
    %1712 = vmatpush1.msra.mxu0 0.0
    %1713 = vmatprep.subr.mxu0 0.0
    %1714 = vmatpush1.msra.mxu0 0.0
    %1715 = vmatprep.subr.mxu0 0.0
    %1716 = vmatpush1.msra.mxu0 0.0
    %1717 = vmatprep.subr.mxu0 0.0
    %1718 = vmatpush1.msra.mxu0 0.0
    %1719 = vmatprep.subr.mxu0 0.0
    %1720 = vmatpush1.msra.mxu0 %v1602
    %1721 = vmatprep.subr.mxu0 0.0
    %1722 = vmatpush1.msra.mxu0 %v1599
    %1723 = vmatprep.subr.mxu0 0.0
    %1724 = vmatpush1.msra.mxu0 %v1596
    %1725 = vmatprep.subr.mxu0 0.0
    %1726 = vmatpush1.msra.mxu0 %v1593
    %1727 = vmatprep.subr.mxu0 0.0
    %1728 = vmatpush2.msra.mxu0 0.0
    %1729 = vmatprep.subr.mxu0 0.0
    %1730 = vmatpush2.msra.mxu0 0.0
    %1731 = vmatprep.subr.mxu0 0.0
    %1732 = vmatpush2.msra.mxu0 0.0
    %1733 = vmatprep.subr.mxu0 0.0
    %1734 = vmatpush2.msra.mxu0 0.0
    %1735 = vmatprep.subr.mxu0 0.0
    %1736 = vmatpush2.msra.mxu0 0.0
    %1737 = vmatprep.subr.mxu0 0.0
    %1738 = vmatpush2.msra.mxu0 0.0
    %1739 = vmatprep.subr.mxu0 0.0
    %1740 = vmatpush2.msra.mxu0 0.0
    %1741 = vmatprep.subr.mxu0 0.0
    %1742 = vmatpush2.msra.mxu0 0.0
    %1743 = vmatprep.subr.mxu0 0.0
    %1744 = vmatpush2.msra.mxu0 0.0
    %1745 = vmatprep.subr.mxu0 0.0
    %1746 = vmatpush2.msra.mxu0 0.0
    %1747 = vmatprep.subr.mxu0 0.0
    %1748 = vmatpush2.msra.mxu0 0.0
    %1749 = vmatprep.subr.mxu0 0.0
    %1750 = vmatpush2.msra.mxu0 0.0
    %1751 = vmatprep.subr.mxu0 0.0
    %1752 = vmatpush2.msra.mxu0 0.0
    %1753 = vmatprep.subr.mxu0 0.0
    %1754 = vmatpush2.msra.mxu0 0.0
    %1755 = vmatprep.subr.mxu0 0.0
    %1756 = vmatpush2.msra.mxu0 0.0
    %1757 = vmatprep.subr.mxu0 0.0
    %1758 = vmatpush2.msra.mxu0 0.0
    %1759 = vmatprep.mubr.f32.mxu0 0.0
    %1760 = vmatmul.mubr.f32.gmra.mxu0 %v1693
    %v1761 = vpop.f32.mrf.mxu0
    %v1762 = vadd.f32 0.0, %v1761
    %v1763 = vpop.f32.mrf.mxu0
    %1764 = vdwg.mxu0
    %1765 = vmatprep.subr.mxu0 0.0
    %1766 = vmatpush1.msra.mxu0 0.0
    %1767 = vmatprep.subr.mxu0 0.0
    %1768 = vmatpush1.msra.mxu0 0.0
    %1769 = vmatprep.subr.mxu0 0.0
    %1770 = vmatpush1.msra.mxu0 0.0
    %1771 = vmatprep.subr.mxu0 0.0
    %1772 = vmatpush1.msra.mxu0 0.0
    %1773 = vmatprep.subr.mxu0 0.0
    %1774 = vmatpush1.msra.mxu0 0.0
    %1775 = vmatprep.subr.mxu0 0.0
    %1776 = vmatpush1.msra.mxu0 0.0
    %1777 = vmatprep.subr.mxu0 0.0
    %1778 = vmatpush1.msra.mxu0 0.0
    %1779 = vmatprep.subr.mxu0 0.0
    %1780 = vmatpush1.msra.mxu0 0.0
    %1781 = vmatprep.subr.mxu0 0.0
    %1782 = vmatpush1.msra.mxu0 0.0
    %1783 = vmatprep.subr.mxu0 0.0
    %1784 = vmatpush1.msra.mxu0 0.0
    %1785 = vmatprep.subr.mxu0 0.0
    %1786 = vmatpush1.msra.mxu0 0.0
    %1787 = vmatprep.subr.mxu0 0.0
    %1788 = vmatpush1.msra.mxu0 0.0
    %1789 = vmatprep.subr.mxu0 0.0
    %1790 = vmatpush1.msra.mxu0 %v1618
    %1791 = vmatprep.subr.mxu0 0.0
    %1792 = vmatpush1.msra.mxu0 %v1615
    %1793 = vmatprep.subr.mxu0 0.0
    %1794 = vmatpush1.msra.mxu0 %v1612
    %1795 = vmatprep.subr.mxu0 0.0
    %1796 = vmatpush1.msra.mxu0 %v1609
    %1797 = vmatprep.subr.mxu0 0.0
    %1798 = vmatpush2.msra.mxu0 0.0
    %1799 = vmatprep.subr.mxu0 0.0
    %1800 = vmatpush2.msra.mxu0 0.0
    %1801 = vmatprep.subr.mxu0 0.0
    %1802 = vmatpush2.msra.mxu0 0.0
    %1803 = vmatprep.subr.mxu0 0.0
    %1804 = vmatpush2.msra.mxu0 0.0
    %1805 = vmatprep.subr.mxu0 0.0
    %1806 = vmatpush2.msra.mxu0 0.0
    %1807 = vmatprep.subr.mxu0 0.0
    %1808 = vmatpush2.msra.mxu0 0.0
    %1809 = vmatprep.subr.mxu0 0.0
    %1810 = vmatpush2.msra.mxu0 0.0
    %1811 = vmatprep.subr.mxu0 0.0
    %1812 = vmatpush2.msra.mxu0 0.0
    %1813 = vmatprep.subr.mxu0 0.0
    %1814 = vmatpush2.msra.mxu0 0.0
    %1815 = vmatprep.subr.mxu0 0.0
    %1816 = vmatpush2.msra.mxu0 0.0
    %1817 = vmatprep.subr.mxu0 0.0
    %1818 = vmatpush2.msra.mxu0 0.0
    %1819 = vmatprep.subr.mxu0 0.0
    %1820 = vmatpush2.msra.mxu0 0.0
    %1821 = vmatprep.subr.mxu0 0.0
    %1822 = vmatpush2.msra.mxu0 0.0
    %1823 = vmatprep.subr.mxu0 0.0
    %1824 = vmatpush2.msra.mxu0 0.0
    %1825 = vmatprep.subr.mxu0 0.0
    %1826 = vmatpush2.msra.mxu0 0.0
    %1827 = vmatprep.subr.mxu0 0.0
    %1828 = vmatpush2.msra.mxu0 0.0
    %1829 = vmatprep.mubr.f32.mxu0 0.0
    %1830 = vmatmul.mubr.f32.gmra.mxu0 %v1693
    %v1831 = vpop.f32.mrf.mxu0
    %v1832 = vadd.f32 0.0, %v1831
    %v1833 = vpop.f32.mrf.mxu0
    %1834 = vdwg.mxu0
    %1836 = vrot.lane.b32.xlu0 %v1762, 1
    %v1837 = vpop.permute.xlu0 %1836
    %1840 = vrot.lane.b32.xlu0 %v1832, 2
    %v1841 = vpop.permute.xlu0 %1840
    %vm1843 = vcmask 7168
    %v1844 = vsel %vm1843, %v1687, %v1837
    %vm1845 = vcmask 15360
    %v1846 = vsel %vm1845, %v1844, %v1841
    %v1847 = vld [vmem:[%s11] sm:$0x1]
    %v1849 = vlaneseq
    %v1850 = vshrl.u32 %v1849, 7
    %v1851 = vsub.s32 0, %v1850
    %v1852 = vrot.slane %v1847, %v1851
    %v1854 = vmul.f32 %v1846, %v1852
    %v1855 = vld [vmem:[%s12] sm:$0x1]
    %v1857 = vlaneseq
    %v1858 = vshrl.u32 %v1857, 7
    %v1859 = vsub.s32 0, %v1858
    %v1860 = vrot.slane %v1855, %v1859
    %v1862 = vadd.f32 %v1854, %v1860
    %vm1863 = vcmask 17408
    %1864 = vst.msk [vmem:[%s16] sm:$0x3] %vm1863, %v1862
    // Predicated region
    $region54: #{waveletflow_forward.1} parent=1 // pred_check
      _
    $region55: #{waveletflow_forward.1} parent=1 // pred_check_branch
      %1866 = sbr.rel (0) target = $region57
    $region56: #{waveletflow_forward.1} parent=1 // pred_region
      _
    $region57: #{waveletflow_forward.1} parent=1 // pred_fallthru
      _
    // Predicated region
    $region58: #{waveletflow_forward.1} parent=1 // pred_check
      _
    $region59: #{waveletflow_forward.1} parent=1 // pred_check_branch
      %1868 = sbr.rel (0) target = $region61
    $region60: #{waveletflow_forward.1} parent=1 // pred_region
      %s1870 = ssub.s32 512, 512
      %1871 = vsyncadd [#allocation3], %s1870
      %s1872 = sshll.u32 [#allocation2], 4
      %s1873 = int_to_ptr.vmem [resolvable:$true] %s1872
      %1878 = dma.vmem_to_hbm [thread:$0]  %s1873, 512, %s14, [#allocation3], 128, 128, 8
    $region61: #{waveletflow_forward.1} parent=1 // pred_fallthru
      _
    // Predicated region
    $region62: #{waveletflow_forward.1} parent=1 // pred_check
      _
    $region63: #{waveletflow_forward.1} parent=1 // pred_check_branch
      %1880 = sbr.rel (0) target = $region65
    $region64: #{waveletflow_forward.1} parent=1 // pred_region
      _
    $region65: #{waveletflow_forward.1} parent=1 // pred_fallthru
      _
    // Predicated region
    $region66: #{waveletflow_forward.1} parent=1 // pred_check
      _
    $region67: #{waveletflow_forward.1} parent=1 // pred_check_branch
      %1882 = sbr.rel (0) target = $region69
    $region68: #{waveletflow_forward.1} parent=1 // pred_region
      _
    $region69: #{waveletflow_forward.1} parent=1 // pred_fallthru
      _
    // Predicated region
    $region70: #{waveletflow_forward.1} parent=1 // pred_check
      _
    $region71: #{waveletflow_forward.1} parent=1 // pred_check_branch
      %1884 = sbr.rel (0) target = $region73
    $region72: #{waveletflow_forward.1} parent=1 // pred_region
      _
    $region73: #{waveletflow_forward.1} parent=1 // pred_fallthru
      _
    // Predicated region
    $region74: #{waveletflow_forward.1} parent=1 // pred_check
      _
    $region75: #{waveletflow_forward.1} parent=1 // pred_check_branch
      %1886 = sbr.rel (0) target = $region77
    $region76: #{waveletflow_forward.1} parent=1 // pred_region
      %1887 = dma.done [#allocation3], 512
    $region77: #{waveletflow_forward.1} parent=1 // pred_fallthru
      _
    // Predicated region
    $region78: #{waveletflow_forward.1} parent=1 // pred_check
      _
    $region79: #{waveletflow_forward.1} parent=1 // pred_check_branch
      %1889 = sbr.rel (0) target = $region81
    $region80: #{waveletflow_forward.1} parent=1 // pred_region
      _
    $region81: #{waveletflow_forward.1} parent=1 // pred_fallthru
      _
    // Predicated region
    $region82: #{waveletflow_forward.1} parent=1 // pred_check
      _
    $region83: #{waveletflow_forward.1} parent=1 // pred_check_branch
      %1891 = sbr.rel (0) target = $region85
    $region84: #{waveletflow_forward.1} parent=1 // pred_region
      _
    $region85: #{waveletflow_forward.1} parent=1 // pred_fallthru
      _
    %1892 = vsyncpa [#allocation3], 1

</llo_original>
